<compile_context>
chip_gen: v6e
topology: v6e:2x2x1
jax: 0.10.0
libtpu: 0.0.40
codegen_flags: <defaults>
</compile_context>

<pallas_src>
import functools

import jax
import jax.numpy as jnp
from jax import lax
from jax.experimental import pallas as pl
from jax.experimental.pallas import tpu as pltpu


def _round_up(x, m):
    return ((x + m - 1) // m) * m


def _cdiv(a, b):
    return (a + b - 1) // b


def _tensorcores_per_chip():
    """Best-effort detection of TensorCores per device (v7x/megacore => 2)."""
    try:
        info = pltpu.get_tpu_info()
        for name in ("num_cores", "core_count", "tensorcores_per_chip",
                     "num_tensorcores"):
            v = getattr(info, name, None)
            if isinstance(v, int) and v > 0:
                return v
    except Exception:
        pass
    try:
        kind = jax.devices()[0].device_kind.lower()
        if ("v7" in kind) or ("v4" in kind) or ("v5p" in kind):
            return 2
    except Exception:
        pass
    return 1


_TENSORCORES = _tensorcores_per_chip()


def residual_block_kernel(x_ref, mask_ref, w1_ref, b1_ref, w2_ref, b2_ref,
                          out_ref, patch1_ref, patch2_ref, *,
                          tap_offsets, x_tap_base, x_res_base):
    """One grid step processes NB images.

    x_ref:      (NB, Cin, Lx)  padded + row-extended flat input, f32
    mask_ref:   (1, Lh)        1.0 on interior pixels of the padded image, else 0
    w1_ref:     (Cw, KK*Cin)   conv1 weights, rows stacked tap-major/chan-minor
    b1_ref:     (Cw, 1)
    w2_ref:     (Cin, KK*Cw)   conv2 weights, same stacking
    b2_ref:     (Cin, 1)
    out_ref:    (NB, Cin, Lo)  Lo = round_up(Hp*Wp, 128); ring/tail junk is
                               cropped by the wrapper
    patch*_ref: VMEM staging buffers for the stacked im2col patch matrices
    """
    nb = x_ref.shape[0]
    cin = x_ref.shape[1]
    cw = b1_ref.shape[0]
    lh = patch1_ref.shape[1]
    lo = out_ref.shape[2]

    # Loop-invariant operands, hoisted out of the per-image loop.
    w1s = w1_ref[...]
    w2s = w2_ref[...]
    b1 = b1_ref[...]
    b2 = b2_ref[...]
    mask = mask_ref[...]

    def one_image(img, carry):
        x_img = x_ref[img]                                   # (Cin, Lx)
        x_act = jnp.maximum(x_img, 0.0)                      # ReLU #1

        # conv1 as ONE MXU matmul: stage the K*K lane-shifted slices as a
        # stacked (KK*Cin, Lh) patch matrix in VMEM, then a single dot.
        for t, off in enumerate(tap_offsets):
            patch1_ref[t * cin:(t + 1) * cin, :] = (
                x_act[:, x_tap_base + off:x_tap_base + off + lh])
        acc1 = jnp.dot(w1s, patch1_ref[...],
                       preferred_element_type=jnp.float32)   # (Cw, Lh)

        # ReLU #2 + zero the padding ring / extension lanes via the interior
        # mask so conv2 sees exact zero padding (keeps flat-offset taps that
        # cross row boundaries correct).
        h1 = jnp.maximum(acc1 + b1, 0.0) * mask              # (Cw, Lh)

        # conv2, same single-matmul scheme on the hidden activation.
        for t, off in enumerate(tap_offsets):
            patch2_ref[t * cw:(t + 1) * cw, :] = h1[:, off:off + lo]
        acc2 = jnp.dot(w2s, patch2_ref[...],
                       preferred_element_type=jnp.float32)   # (Cin, Lo)

        # Residual add with the original (pre-ReLU) input; lane-dense store.
        x_res = x_img[:, x_res_base:x_res_base + lo]
        out_ref[img] = (x_res + acc2 + b2).astype(out_ref.dtype)
        return carry

    lax.fori_loop(0, nb, one_image, 0, unroll=(nb <= 4))


@functools.partial(jax.jit, static_argnames=("kernel_size", "padding"))
def residual_block_forward(x_nchw, w1, b1, w2, b2, *, kernel_size=3, padding=1):
    """x_nchw: (N, C, H, W) float32; weights in PyTorch OIHW layout."""
    N, C, H, W = x_nchw.shape
    Cw = w1.shape[0]
    K, p = kernel_size, padding
    assert 2 * p == K - 1, "residual add requires 'same' conv output size"

    Hp, Wp = H + 2 * p, W + 2 * p
    HpWp = Hp * Wp
    S = p * Wp + p                      # max |flat-index shift| of a conv tap
    KK = K * K

    # Per-image lane extents; 128-aligned output lanes => unmasked stores.
    Lo = _round_up(HpWp, 128)           # output lanes per image (padded coords)
    Lh = Lo + 2 * S                     # hidden-activation lanes per image

    # Fold the +/-2S flat extension (and the alignment tail) into extra zero
    # ROWS of the single spatial pad, so the input is materialized once.
    rows_top = _cdiv(2 * S, Wp)
    rows_bot = _cdiv(Lo - HpWp + 2 * S, Wp)
    XL = rows_top * Wp                  # lanes before flat index 0
    Lx = (rows_top + Hp + rows_bot) * Wp
    x_tap_base = XL - 2 * S             # conv1 tap base offset into x lanes
    assert x_tap_base >= 0 and XL + Lo + 2 * S <= Lx

    # Images per grid step: big enough to amortize per-step overhead and make
    # decent-size DMAs, bounded by a VMEM byte budget; on multi-TensorCore
    # chips keep >= 2 grid steps so both cores get work.
    per_image_bytes = C * (Lx + Lo) * 4
    NB = max(1, min(N, 16, (1 << 20) // max(per_image_bytes, 1)))
    if _TENSORCORES >= 2 and N >= 2:
        NB = min(NB, _cdiv(N, 2))
    Np = _cdiv(N, NB) * NB              # pad batch to a multiple of NB

    # Single input materialization: batch pad + spatial pad (extension rows
    # folded in), then a free reshape to the per-image flat layout.
    xp = jnp.pad(x_nchw, ((0, Np - N), (0, 0),
                          (p + rows_top, p + rows_bot), (p, p)))
    x_ext = xp.reshape(Np, C, Lx)       # (Np, C, Lx)

    # Interior mask over hidden-activation lanes (hidden flat index = j - S).
    j = jnp.arange(Lh)
    n = j - S
    row = n // Wp
    col = n - row * Wp
    interior = ((n >= 0) & (n < HpWp) &
                (row >= p) & (row < p + H) & (col >= p) & (col < p + W))
    mask = interior.astype(jnp.float32)[None, :]                 # (1, Lh)

    # Stacked per-tap weights: row r = (kh*K + kw)*Cin + c  (tap-major).
    w1_s = jnp.transpose(w1, (2, 3, 1, 0)).reshape(KK * C, Cw).T   # (Cw, KK*C)
    w2_s = jnp.transpose(w2, (2, 3, 1, 0)).reshape(KK * Cw, C).T   # (C, KK*Cw)
    b1_2d = b1.reshape(Cw, 1).astype(jnp.float32)
    b2_2d = b2.reshape(C, 1).astype(jnp.float32)

    tap_offsets = tuple(kh * Wp + kw for kh in range(K) for kw in range(K))
    kernel = functools.partial(residual_block_kernel,
                               tap_offsets=tap_offsets,
                               x_tap_base=x_tap_base,
                               x_res_base=XL)

    # Explicit VMEM budget (double-buffered blocks + constants + scratch),
    # kept inside v7x's 64 MiB physical VMEM.
    vmem_need = (2 * (NB * C * (Lx + Lo) * 4 + Lh * 4
                      + (Cw * KK * C + C * KK * Cw + Cw + C) * 4)
                 + (KK * C * Lh + KK * Cw * Lo) * 4)
    vmem_limit = int(min(max(2 * vmem_need, 8 << 20), 64 << 20))

    out = pl.pallas_call(
        kernel,
        out_shape=jax.ShapeDtypeStruct((Np, C, Lo), x_nchw.dtype),
        grid_spec=pltpu.PrefetchScalarGridSpec(
            num_scalar_prefetch=0,
            grid=(Np // NB,),
            in_specs=[
                pl.BlockSpec((NB, C, Lx), lambda i: (i, 0, 0)),
                pl.BlockSpec((1, Lh), lambda i: (0, 0)),
                pl.BlockSpec((Cw, KK * C), lambda i: (0, 0)),
                pl.BlockSpec((Cw, 1), lambda i: (0, 0)),
                pl.BlockSpec((C, KK * Cw), lambda i: (0, 0)),
                pl.BlockSpec((C, 1), lambda i: (0, 0)),
            ],
            out_specs=pl.BlockSpec((NB, C, Lo), lambda i: (i, 0, 0)),
            scratch_shapes=[
                pltpu.VMEM((KK * C, Lh), jnp.float32),    # conv1 patch staging
                pltpu.VMEM((KK * Cw, Lo), jnp.float32),   # conv2 patch staging
            ],
        ),
        compiler_params=pltpu.CompilerParams(
            dimension_semantics=("parallel",),
            vmem_limit_bytes=vmem_limit),
    )(x_ext, mask, w1_s, b1_2d, w2_s, b2_2d)

    # Crop: drop batch padding, the 128-alignment tail and the padded border.
    out = out[:N, :, :HpWp].reshape(N, C, Hp, Wp)[:, :, p:p + H, p:p + W]
    return out


def reference_forward(x, w1, b1, w2, b2, *, padding=1):
    """Pure-JAX reference matching the PyTorch module (NCHW / OIHW)."""
    def conv(h, w, b):
        y = jax.lax.conv_general_dilated(
            h, w, window_strides=(1, 1),
            padding=[(padding, padding), (padding, padding)],
            dimension_numbers=("NCHW", "OIHW", "NCHW"))
        return y + b[None, :, None, None]
    h = jax.nn.relu(x)          # activation(inplace=False)
    h = conv(h, w1, b1)         # Conv2d(len_in -> width)
    h = jax.nn.relu(h)          # activation(inplace=True)
    h = conv(h, w2, b2)         # Conv2d(width -> len_in)
    return x + h                # residual


if __name__ == "__main__":
    # small, module-consistent shapes: len_in=4 channels, width=2*len_in=8
    N, C, H, W = 2, 4, 16, 16
    Cw = 2 * C
    K = 3

    key = jax.random.PRNGKey(0)
    kx, kw1, kb1, kw2, kb2, kx2 = jax.random.split(key, 6)
    x = jax.random.normal(kx, (N, C, H, W), dtype=jnp.float32)
    # deterministic synthetic parameters (PyTorch OIHW conv layout)
    w1 = 0.1 * jax.random.normal(kw1, (Cw, C, K, K), dtype=jnp.float32)
    b1 = 0.1 * jax.random.normal(kb1, (Cw,), dtype=jnp.float32)
    w2 = 0.1 * jax.random.normal(kw2, (C, Cw, K, K), dtype=jnp.float32)
    b2 = 0.1 * jax.random.normal(kb2, (C,), dtype=jnp.float32)

    out = residual_block_forward(x, w1, b1, w2, b2, kernel_size=K, padding=1)
    out = jax.block_until_ready(out)
    ref = reference_forward(x, w1, b1, w2, b2, padding=1)
    assert out.shape == (N, C, H, W) and out.dtype == jnp.float32
    assert jnp.allclose(out, ref, atol=1e-4, rtol=1e-4), "mismatch vs reference"

    # second config: odd batch (exercises batch padding) and a spatial size
    # whose flat extent is not 128-friendly (exercises the alignment tail).
    N2, H2, W2 = 3, 9, 9
    x2 = jax.random.normal(kx2, (N2, C, H2, W2), dtype=jnp.float32)
    out2 = jax.block_until_ready(
        residual_block_forward(x2, w1, b1, w2, b2, kernel_size=K, padding=1))
    ref2 = reference_forward(x2, w1, b1, w2, b2, padding=1)
    assert out2.shape == (N2, C, H2, W2)
    assert jnp.allclose(out2, ref2, atol=1e-4, rtol=1e-4), "mismatch (cfg 2)"

    print("KERNEL_OK")
</pallas_src>

<mosaic_0001>
module attributes {stable_mosaic.version = 11 : i64} {
  func.func @residual_block_kernel(%arg0: i32, %arg1: memref<2x4x486xf32, #tpu.memory_space<vmem>>, %arg2: memref<1x422xf32, #tpu.memory_space<vmem>>, %arg3: memref<8x36xf32, #tpu.memory_space<vmem>>, %arg4: memref<8x1xf32, #tpu.memory_space<vmem>>, %arg5: memref<4x72xf32, #tpu.memory_space<vmem>>, %arg6: memref<4x1xf32, #tpu.memory_space<vmem>>, %arg7: memref<2x4x384xf32, #tpu.memory_space<vmem>>, %arg8: memref<36x422xf32, #tpu.memory_space<vmem>>, %arg9: memref<72x384xf32, #tpu.memory_space<vmem>>) attributes {dimension_semantics = [#tpu.dimension_semantics<parallel>], iteration_bounds = array<i64: 1>, scalar_prefetch = 0 : i64, scratch_operands = 2 : i64, tpu.core_type = #tpu.core_type<tc>, window_params = [{transform_indices = @transform_0, window_bounds = array<i64: 2, 4, 486>}, {pipeline_mode = #tpu.pipeline_mode<synchronous>, transform_indices = @transform_1, window_bounds = array<i64: 1, 422>}, {pipeline_mode = #tpu.pipeline_mode<synchronous>, transform_indices = @transform_2, window_bounds = array<i64: 8, 36>}, {pipeline_mode = #tpu.pipeline_mode<synchronous>, transform_indices = @transform_3, window_bounds = array<i64: 8, 1>}, {pipeline_mode = #tpu.pipeline_mode<synchronous>, transform_indices = @transform_4, window_bounds = array<i64: 4, 72>}, {pipeline_mode = #tpu.pipeline_mode<synchronous>, transform_indices = @transform_5, window_bounds = array<i64: 4, 1>}, {transform_indices = @transform_6, window_bounds = array<i64: 2, 4, 384>}]} {
    %c0 = arith.constant 0 : index
    %c0_0 = arith.constant 0 : index
    %0 = vector.load %arg3[%c0, %c0_0] : memref<8x36xf32, #tpu.memory_space<vmem>>, vector<8x36xf32>
    %c0_1 = arith.constant 0 : index
    %c0_2 = arith.constant 0 : index
    %1 = vector.load %arg5[%c0_1, %c0_2] : memref<4x72xf32, #tpu.memory_space<vmem>>, vector<4x72xf32>
    %c0_3 = arith.constant 0 : index
    %c0_4 = arith.constant 0 : index
    %2 = vector.load %arg4[%c0_3, %c0_4] : memref<8x1xf32, #tpu.memory_space<vmem>>, vector<8x1xf32>
    %c0_5 = arith.constant 0 : index
    %c0_6 = arith.constant 0 : index
    %3 = vector.load %arg6[%c0_5, %c0_6] : memref<4x1xf32, #tpu.memory_space<vmem>>, vector<4x1xf32>
    %c0_7 = arith.constant 0 : index
    %c0_8 = arith.constant 0 : index
    %4 = vector.load %arg2[%c0_7, %c0_8] : memref<1x422xf32, #tpu.memory_space<vmem>>, vector<1x422xf32>
    %c0_i32 = arith.constant 0 : i32
    %5 = arith.index_cast %c0_i32 : i32 to index
    %c0_9 = arith.constant 0 : index
    %c0_10 = arith.constant 0 : index
    %6 = vector.load %arg1[%5, %c0_9, %c0_10] : memref<2x4x486xf32, #tpu.memory_space<vmem>>, vector<1x4x486xf32>
    %7 = vector.shape_cast %6 : vector<1x4x486xf32> to vector<4x486xf32>
    %cst = arith.constant 0.000000e+00 : f32
    %8 = vector.broadcast %cst : f32 to vector<4x486xf32>
    %9 = arith.maximumf %7, %8 : vector<4x486xf32>
    %10 = vector.extract_strided_slice %9 {offsets = [0, 16], sizes = [4, 422], strides = [1, 1]} : vector<4x486xf32> to vector<4x422xf32>
    %c0_11 = arith.constant 0 : index
    %c0_12 = arith.constant 0 : index
    %11 = vector.load %arg8[%c0_11, %c0_12] : memref<36x422xf32, #tpu.memory_space<vmem>>, vector<4x422xf32>
    tpu.vector_store %arg8[%c0_11, %c0_12], %10 {strides = array<i32>} : memref<36x422xf32, #tpu.memory_space<vmem>>, vector<4x422xf32>,
    %12 = vector.extract_strided_slice %9 {offsets = [0, 17], sizes = [4, 422], strides = [1, 1]} : vector<4x486xf32> to vector<4x422xf32>
    %c4 = arith.constant 4 : index
    %c0_13 = arith.constant 0 : index
    %13 = vector.load %arg8[%c4, %c0_13] : memref<36x422xf32, #tpu.memory_space<vmem>>, vector<4x422xf32>
    tpu.vector_store %arg8[%c4, %c0_13], %12 {strides = array<i32>} : memref<36x422xf32, #tpu.memory_space<vmem>>, vector<4x422xf32>,
    %14 = vector.extract_strided_slice %9 {offsets = [0, 18], sizes = [4, 422], strides = [1, 1]} : vector<4x486xf32> to vector<4x422xf32>
    %c8 = arith.constant 8 : index
    %c0_14 = arith.constant 0 : index
    %15 = vector.load %arg8[%c8, %c0_14] : memref<36x422xf32, #tpu.memory_space<vmem>>, vector<4x422xf32>
    tpu.vector_store %arg8[%c8, %c0_14], %14 {strides = array<i32>} : memref<36x422xf32, #tpu.memory_space<vmem>>, vector<4x422xf32>,
    %16 = vector.extract_strided_slice %9 {offsets = [0, 34], sizes = [4, 422], strides = [1, 1]} : vector<4x486xf32> to vector<4x422xf32>
    %c12 = arith.constant 12 : index
    %c0_15 = arith.constant 0 : index
    %17 = vector.load %arg8[%c12, %c0_15] : memref<36x422xf32, #tpu.memory_space<vmem>>, vector<4x422xf32>
    tpu.vector_store %arg8[%c12, %c0_15], %16 {strides = array<i32>} : memref<36x422xf32, #tpu.memory_space<vmem>>, vector<4x422xf32>,
    %18 = vector.extract_strided_slice %9 {offsets = [0, 35], sizes = [4, 422], strides = [1, 1]} : vector<4x486xf32> to vector<4x422xf32>
    %c16 = arith.constant 16 : index
    %c0_16 = arith.constant 0 : index
    %19 = vector.load %arg8[%c16, %c0_16] : memref<36x422xf32, #tpu.memory_space<vmem>>, vector<4x422xf32>
    tpu.vector_store %arg8[%c16, %c0_16], %18 {strides = array<i32>} : memref<36x422xf32, #tpu.memory_space<vmem>>, vector<4x422xf32>,
    %20 = vector.extract_strided_slice %9 {offsets = [0, 36], sizes = [4, 422], strides = [1, 1]} : vector<4x486xf32> to vector<4x422xf32>
    %c20 = arith.constant 20 : index
    %c0_17 = arith.constant 0 : index
    %21 = vector.load %arg8[%c20, %c0_17] : memref<36x422xf32, #tpu.memory_space<vmem>>, vector<4x422xf32>
    tpu.vector_store %arg8[%c20, %c0_17], %20 {strides = array<i32>} : memref<36x422xf32, #tpu.memory_space<vmem>>, vector<4x422xf32>,
    %22 = vector.extract_strided_slice %9 {offsets = [0, 52], sizes = [4, 422], strides = [1, 1]} : vector<4x486xf32> to vector<4x422xf32>
    %c24 = arith.constant 24 : index
    %c0_18 = arith.constant 0 : index
    %23 = vector.load %arg8[%c24, %c0_18] : memref<36x422xf32, #tpu.memory_space<vmem>>, vector<4x422xf32>
    tpu.vector_store %arg8[%c24, %c0_18], %22 {strides = array<i32>} : memref<36x422xf32, #tpu.memory_space<vmem>>, vector<4x422xf32>,
    %24 = vector.extract_strided_slice %9 {offsets = [0, 53], sizes = [4, 422], strides = [1, 1]} : vector<4x486xf32> to vector<4x422xf32>
    %c28 = arith.constant 28 : index
    %c0_19 = arith.constant 0 : index
    %25 = vector.load %arg8[%c28, %c0_19] : memref<36x422xf32, #tpu.memory_space<vmem>>, vector<4x422xf32>
    tpu.vector_store %arg8[%c28, %c0_19], %24 {strides = array<i32>} : memref<36x422xf32, #tpu.memory_space<vmem>>, vector<4x422xf32>,
    %26 = vector.extract_strided_slice %9 {offsets = [0, 54], sizes = [4, 422], strides = [1, 1]} : vector<4x486xf32> to vector<4x422xf32>
    %c32 = arith.constant 32 : index
    %c0_20 = arith.constant 0 : index
    %27 = vector.load %arg8[%c32, %c0_20] : memref<36x422xf32, #tpu.memory_space<vmem>>, vector<4x422xf32>
    tpu.vector_store %arg8[%c32, %c0_20], %26 {strides = array<i32>} : memref<36x422xf32, #tpu.memory_space<vmem>>, vector<4x422xf32>,
    %c0_21 = arith.constant 0 : index
    %c0_22 = arith.constant 0 : index
    %28 = vector.load %arg8[%c0_21, %c0_22] : memref<36x422xf32, #tpu.memory_space<vmem>>, vector<36x422xf32>
    %cst_23 = arith.constant dense<0.000000e+00> : vector<8x422xf32>
    %29 = tpu.matmul %0, %28, %cst_23 {dimension_numbers = #tpu.dot_dimension_numbers<[1], [0], [0], [1], [0, 0, 1, 1], [], []>} : vector<8x36xf32>, vector<36x422xf32>, vector<8x422xf32> -> vector<8x422xf32>
    %30 = vector.broadcast %2 : vector<8x1xf32> to vector<8x422xf32>
    %31 = arith.addf %29, %30 : vector<8x422xf32>
    %cst_24 = arith.constant 0.000000e+00 : f32
    %32 = vector.broadcast %cst_24 : f32 to vector<8x422xf32>
    %33 = arith.maximumf %31, %32 : vector<8x422xf32>
    %34 = vector.broadcast %4 : vector<1x422xf32> to vector<8x422xf32>
    %35 = arith.mulf %33, %34 : vector<8x422xf32>
    %36 = vector.extract_strided_slice %35 {offsets = [0, 0], sizes = [8, 384], strides = [1, 1]} : vector<8x422xf32> to vector<8x384xf32>
    %c0_25 = arith.constant 0 : index
    %c0_26 = arith.constant 0 : index
    %37 = vector.load %arg9[%c0_25, %c0_26] : memref<72x384xf32, #tpu.memory_space<vmem>>, vector<8x384xf32>
    tpu.vector_store %arg9[%c0_25, %c0_26], %36 {strides = array<i32>} : memref<72x384xf32, #tpu.memory_space<vmem>>, vector<8x384xf32>,
    %38 = vector.extract_strided_slice %35 {offsets = [0, 1], sizes = [8, 384], strides = [1, 1]} : vector<8x422xf32> to vector<8x384xf32>
    %c8_27 = arith.constant 8 : index
    %c0_28 = arith.constant 0 : index
    %39 = vector.load %arg9[%c8_27, %c0_28] : memref<72x384xf32, #tpu.memory_space<vmem>>, vector<8x384xf32>
    tpu.vector_store %arg9[%c8_27, %c0_28], %38 {strides = array<i32>} : memref<72x384xf32, #tpu.memory_space<vmem>>, vector<8x384xf32>,
    %40 = vector.extract_strided_slice %35 {offsets = [0, 2], sizes = [8, 384], strides = [1, 1]} : vector<8x422xf32> to vector<8x384xf32>
    %c16_29 = arith.constant 16 : index
    %c0_30 = arith.constant 0 : index
    %41 = vector.load %arg9[%c16_29, %c0_30] : memref<72x384xf32, #tpu.memory_space<vmem>>, vector<8x384xf32>
    tpu.vector_store %arg9[%c16_29, %c0_30], %40 {strides = array<i32>} : memref<72x384xf32, #tpu.memory_space<vmem>>, vector<8x384xf32>,
    %42 = vector.extract_strided_slice %35 {offsets = [0, 18], sizes = [8, 384], strides = [1, 1]} : vector<8x422xf32> to vector<8x384xf32>
    %c24_31 = arith.constant 24 : index
    %c0_32 = arith.constant 0 : index
    %43 = vector.load %arg9[%c24_31, %c0_32] : memref<72x384xf32, #tpu.memory_space<vmem>>, vector<8x384xf32>
    tpu.vector_store %arg9[%c24_31, %c0_32], %42 {strides = array<i32>} : memref<72x384xf32, #tpu.memory_space<vmem>>, vector<8x384xf32>,
    %44 = vector.extract_strided_slice %35 {offsets = [0, 19], sizes = [8, 384], strides = [1, 1]} : vector<8x422xf32> to vector<8x384xf32>
    %c32_33 = arith.constant 32 : index
    %c0_34 = arith.constant 0 : index
    %45 = vector.load %arg9[%c32_33, %c0_34] : memref<72x384xf32, #tpu.memory_space<vmem>>, vector<8x384xf32>
    tpu.vector_store %arg9[%c32_33, %c0_34], %44 {strides = array<i32>} : memref<72x384xf32, #tpu.memory_space<vmem>>, vector<8x384xf32>,
    %46 = vector.extract_strided_slice %35 {offsets = [0, 20], sizes = [8, 384], strides = [1, 1]} : vector<8x422xf32> to vector<8x384xf32>
    %c40 = arith.constant 40 : index
    %c0_35 = arith.constant 0 : index
    %47 = vector.load %arg9[%c40, %c0_35] : memref<72x384xf32, #tpu.memory_space<vmem>>, vector<8x384xf32>
    tpu.vector_store %arg9[%c40, %c0_35], %46 {strides = array<i32>} : memref<72x384xf32, #tpu.memory_space<vmem>>, vector<8x384xf32>,
    %48 = vector.extract_strided_slice %35 {offsets = [0, 36], sizes = [8, 384], strides = [1, 1]} : vector<8x422xf32> to vector<8x384xf32>
    %c48 = arith.constant 48 : index
    %c0_36 = arith.constant 0 : index
    %49 = vector.load %arg9[%c48, %c0_36] : memref<72x384xf32, #tpu.memory_space<vmem>>, vector<8x384xf32>
    tpu.vector_store %arg9[%c48, %c0_36], %48 {strides = array<i32>} : memref<72x384xf32, #tpu.memory_space<vmem>>, vector<8x384xf32>,
    %50 = vector.extract_strided_slice %35 {offsets = [0, 37], sizes = [8, 384], strides = [1, 1]} : vector<8x422xf32> to vector<8x384xf32>
    %c56 = arith.constant 56 : index
    %c0_37 = arith.constant 0 : index
    %51 = vector.load %arg9[%c56, %c0_37] : memref<72x384xf32, #tpu.memory_space<vmem>>, vector<8x384xf32>
    tpu.vector_store %arg9[%c56, %c0_37], %50 {strides = array<i32>} : memref<72x384xf32, #tpu.memory_space<vmem>>, vector<8x384xf32>,
    %52 = vector.extract_strided_slice %35 {offsets = [0, 38], sizes = [8, 384], strides = [1, 1]} : vector<8x422xf32> to vector<8x384xf32>
    %c64 = arith.constant 64 : index
    %c0_38 = arith.constant 0 : index
    %53 = vector.load %arg9[%c64, %c0_38] : memref<72x384xf32, #tpu.memory_space<vmem>>, vector<8x384xf32>
    tpu.vector_store %arg9[%c64, %c0_38], %52 {strides = array<i32>} : memref<72x384xf32, #tpu.memory_space<vmem>>, vector<8x384xf32>,
    %c0_39 = arith.constant 0 : index
    %c0_40 = arith.constant 0 : index
    %54 = vector.load %arg9[%c0_39, %c0_40] : memref<72x384xf32, #tpu.memory_space<vmem>>, vector<72x384xf32>
    %cst_41 = arith.constant dense<0.000000e+00> : vector<4x384xf32>
    %55 = tpu.matmul %1, %54, %cst_41 {dimension_numbers = #tpu.dot_dimension_numbers<[1], [0], [0], [1], [0, 0, 1, 1], [], []>} : vector<4x72xf32>, vector<72x384xf32>, vector<4x384xf32> -> vector<4x384xf32>
    %56 = vector.extract_strided_slice %7 {offsets = [0, 54], sizes = [4, 384], strides = [1, 1]} : vector<4x486xf32> to vector<4x384xf32>
    %57 = arith.addf %56, %55 : vector<4x384xf32>
    %58 = vector.broadcast %3 : vector<4x1xf32> to vector<4x384xf32>
    %59 = arith.addf %57, %58 : vector<4x384xf32>
    %60 = arith.index_cast %c0_i32 : i32 to index
    %c0_42 = arith.constant 0 : index
    %c0_43 = arith.constant 0 : index
    %61 = vector.load %arg7[%60, %c0_42, %c0_43] : memref<2x4x384xf32, #tpu.memory_space<vmem>>, vector<1x4x384xf32>
    %62 = vector.shape_cast %61 : vector<1x4x384xf32> to vector<4x384xf32>
    %63 = vector.shape_cast %59 : vector<4x384xf32> to vector<1x4x384xf32>
    tpu.vector_store %arg7[%60, %c0_42, %c0_43], %63 {strides = array<i32>} : memref<2x4x384xf32, #tpu.memory_space<vmem>>, vector<1x4x384xf32>,
    %c1_i32 = arith.constant 1 : i32
    %64 = arith.index_cast %c1_i32 : i32 to index
    %c0_44 = arith.constant 0 : index
    %c0_45 = arith.constant 0 : index
    %65 = vector.load %arg1[%64, %c0_44, %c0_45] : memref<2x4x486xf32, #tpu.memory_space<vmem>>, vector<1x4x486xf32>
    %66 = vector.shape_cast %65 : vector<1x4x486xf32> to vector<4x486xf32>
    %cst_46 = arith.constant 0.000000e+00 : f32
    %67 = vector.broadcast %cst_46 : f32 to vector<4x486xf32>
    %68 = arith.maximumf %66, %67 : vector<4x486xf32>
    %69 = vector.extract_strided_slice %68 {offsets = [0, 16], sizes = [4, 422], strides = [1, 1]} : vector<4x486xf32> to vector<4x422xf32>
    %c0_47 = arith.constant 0 : index
    %c0_48 = arith.constant 0 : index
    %70 = vector.load %arg8[%c0_47, %c0_48] : memref<36x422xf32, #tpu.memory_space<vmem>>, vector<4x422xf32>
    tpu.vector_store %arg8[%c0_47, %c0_48], %69 {strides = array<i32>} : memref<36x422xf32, #tpu.memory_space<vmem>>, vector<4x422xf32>,
    %71 = vector.extract_strided_slice %68 {offsets = [0, 17], sizes = [4, 422], strides = [1, 1]} : vector<4x486xf32> to vector<4x422xf32>
    %c4_49 = arith.constant 4 : index
    %c0_50 = arith.constant 0 : index
    %72 = vector.load %arg8[%c4_49, %c0_50] : memref<36x422xf32, #tpu.memory_space<vmem>>, vector<4x422xf32>
    tpu.vector_store %arg8[%c4_49, %c0_50], %71 {strides = array<i32>} : memref<36x422xf32, #tpu.memory_space<vmem>>, vector<4x422xf32>,
    %73 = vector.extract_strided_slice %68 {offsets = [0, 18], sizes = [4, 422], strides = [1, 1]} : vector<4x486xf32> to vector<4x422xf32>
    %c8_51 = arith.constant 8 : index
    %c0_52 = arith.constant 0 : index
    %74 = vector.load %arg8[%c8_51, %c0_52] : memref<36x422xf32, #tpu.memory_space<vmem>>, vector<4x422xf32>
    tpu.vector_store %arg8[%c8_51, %c0_52], %73 {strides = array<i32>} : memref<36x422xf32, #tpu.memory_space<vmem>>, vector<4x422xf32>,
    %75 = vector.extract_strided_slice %68 {offsets = [0, 34], sizes = [4, 422], strides = [1, 1]} : vector<4x486xf32> to vector<4x422xf32>
    %c12_53 = arith.constant 12 : index
    %c0_54 = arith.constant 0 : index
    %76 = vector.load %arg8[%c12_53, %c0_54] : memref<36x422xf32, #tpu.memory_space<vmem>>, vector<4x422xf32>
    tpu.vector_store %arg8[%c12_53, %c0_54], %75 {strides = array<i32>} : memref<36x422xf32, #tpu.memory_space<vmem>>, vector<4x422xf32>,
    %77 = vector.extract_strided_slice %68 {offsets = [0, 35], sizes = [4, 422], strides = [1, 1]} : vector<4x486xf32> to vector<4x422xf32>
    %c16_55 = arith.constant 16 : index
    %c0_56 = arith.constant 0 : index
    %78 = vector.load %arg8[%c16_55, %c0_56] : memref<36x422xf32, #tpu.memory_space<vmem>>, vector<4x422xf32>
    tpu.vector_store %arg8[%c16_55, %c0_56], %77 {strides = array<i32>} : memref<36x422xf32, #tpu.memory_space<vmem>>, vector<4x422xf32>,
    %79 = vector.extract_strided_slice %68 {offsets = [0, 36], sizes = [4, 422], strides = [1, 1]} : vector<4x486xf32> to vector<4x422xf32>
    %c20_57 = arith.constant 20 : index
    %c0_58 = arith.constant 0 : index
    %80 = vector.load %arg8[%c20_57, %c0_58] : memref<36x422xf32, #tpu.memory_space<vmem>>, vector<4x422xf32>
    tpu.vector_store %arg8[%c20_57, %c0_58], %79 {strides = array<i32>} : memref<36x422xf32, #tpu.memory_space<vmem>>, vector<4x422xf32>,
    %81 = vector.extract_strided_slice %68 {offsets = [0, 52], sizes = [4, 422], strides = [1, 1]} : vector<4x486xf32> to vector<4x422xf32>
    %c24_59 = arith.constant 24 : index
    %c0_60 = arith.constant 0 : index
    %82 = vector.load %arg8[%c24_59, %c0_60] : memref<36x422xf32, #tpu.memory_space<vmem>>, vector<4x422xf32>
    tpu.vector_store %arg8[%c24_59, %c0_60], %81 {strides = array<i32>} : memref<36x422xf32, #tpu.memory_space<vmem>>, vector<4x422xf32>,
    %83 = vector.extract_strided_slice %68 {offsets = [0, 53], sizes = [4, 422], strides = [1, 1]} : vector<4x486xf32> to vector<4x422xf32>
    %c28_61 = arith.constant 28 : index
    %c0_62 = arith.constant 0 : index
    %84 = vector.load %arg8[%c28_61, %c0_62] : memref<36x422xf32, #tpu.memory_space<vmem>>, vector<4x422xf32>
    tpu.vector_store %arg8[%c28_61, %c0_62], %83 {strides = array<i32>} : memref<36x422xf32, #tpu.memory_space<vmem>>, vector<4x422xf32>,
    %85 = vector.extract_strided_slice %68 {offsets = [0, 54], sizes = [4, 422], strides = [1, 1]} : vector<4x486xf32> to vector<4x422xf32>
    %c32_63 = arith.constant 32 : index
    %c0_64 = arith.constant 0 : index
    %86 = vector.load %arg8[%c32_63, %c0_64] : memref<36x422xf32, #tpu.memory_space<vmem>>, vector<4x422xf32>
    tpu.vector_store %arg8[%c32_63, %c0_64], %85 {strides = array<i32>} : memref<36x422xf32, #tpu.memory_space<vmem>>, vector<4x422xf32>,
    %c0_65 = arith.constant 0 : index
    %c0_66 = arith.constant 0 : index
    %87 = vector.load %arg8[%c0_65, %c0_66] : memref<36x422xf32, #tpu.memory_space<vmem>>, vector<36x422xf32>
    %cst_67 = arith.constant dense<0.000000e+00> : vector<8x422xf32>
    %88 = tpu.matmul %0, %87, %cst_67 {dimension_numbers = #tpu.dot_dimension_numbers<[1], [0], [0], [1], [0, 0, 1, 1], [], []>} : vector<8x36xf32>, vector<36x422xf32>, vector<8x422xf32> -> vector<8x422xf32>
    %89 = vector.broadcast %2 : vector<8x1xf32> to vector<8x422xf32>
    %90 = arith.addf %88, %89 : vector<8x422xf32>
    %cst_68 = arith.constant 0.000000e+00 : f32
    %91 = vector.broadcast %cst_68 : f32 to vector<8x422xf32>
    %92 = arith.maximumf %90, %91 : vector<8x422xf32>
    %93 = vector.broadcast %4 : vector<1x422xf32> to vector<8x422xf32>
    %94 = arith.mulf %92, %93 : vector<8x422xf32>
    %95 = vector.extract_strided_slice %94 {offsets = [0, 0], sizes = [8, 384], strides = [1, 1]} : vector<8x422xf32> to vector<8x384xf32>
    %c0_69 = arith.constant 0 : index
    %c0_70 = arith.constant 0 : index
    %96 = vector.load %arg9[%c0_69, %c0_70] : memref<72x384xf32, #tpu.memory_space<vmem>>, vector<8x384xf32>
    tpu.vector_store %arg9[%c0_69, %c0_70], %95 {strides = array<i32>} : memref<72x384xf32, #tpu.memory_space<vmem>>, vector<8x384xf32>,
    %97 = vector.extract_strided_slice %94 {offsets = [0, 1], sizes = [8, 384], strides = [1, 1]} : vector<8x422xf32> to vector<8x384xf32>
    %c8_71 = arith.constant 8 : index
    %c0_72 = arith.constant 0 : index
    %98 = vector.load %arg9[%c8_71, %c0_72] : memref<72x384xf32, #tpu.memory_space<vmem>>, vector<8x384xf32>
    tpu.vector_store %arg9[%c8_71, %c0_72], %97 {strides = array<i32>} : memref<72x384xf32, #tpu.memory_space<vmem>>, vector<8x384xf32>,
    %99 = vector.extract_strided_slice %94 {offsets = [0, 2], sizes = [8, 384], strides = [1, 1]} : vector<8x422xf32> to vector<8x384xf32>
    %c16_73 = arith.constant 16 : index
    %c0_74 = arith.constant 0 : index
    %100 = vector.load %arg9[%c16_73, %c0_74] : memref<72x384xf32, #tpu.memory_space<vmem>>, vector<8x384xf32>
    tpu.vector_store %arg9[%c16_73, %c0_74], %99 {strides = array<i32>} : memref<72x384xf32, #tpu.memory_space<vmem>>, vector<8x384xf32>,
    %101 = vector.extract_strided_slice %94 {offsets = [0, 18], sizes = [8, 384], strides = [1, 1]} : vector<8x422xf32> to vector<8x384xf32>
    %c24_75 = arith.constant 24 : index
    %c0_76 = arith.constant 0 : index
    %102 = vector.load %arg9[%c24_75, %c0_76] : memref<72x384xf32, #tpu.memory_space<vmem>>, vector<8x384xf32>
    tpu.vector_store %arg9[%c24_75, %c0_76], %101 {strides = array<i32>} : memref<72x384xf32, #tpu.memory_space<vmem>>, vector<8x384xf32>,
    %103 = vector.extract_strided_slice %94 {offsets = [0, 19], sizes = [8, 384], strides = [1, 1]} : vector<8x422xf32> to vector<8x384xf32>
    %c32_77 = arith.constant 32 : index
    %c0_78 = arith.constant 0 : index
    %104 = vector.load %arg9[%c32_77, %c0_78] : memref<72x384xf32, #tpu.memory_space<vmem>>, vector<8x384xf32>
    tpu.vector_store %arg9[%c32_77, %c0_78], %103 {strides = array<i32>} : memref<72x384xf32, #tpu.memory_space<vmem>>, vector<8x384xf32>,
    %105 = vector.extract_strided_slice %94 {offsets = [0, 20], sizes = [8, 384], strides = [1, 1]} : vector<8x422xf32> to vector<8x384xf32>
    %c40_79 = arith.constant 40 : index
    %c0_80 = arith.constant 0 : index
    %106 = vector.load %arg9[%c40_79, %c0_80] : memref<72x384xf32, #tpu.memory_space<vmem>>, vector<8x384xf32>
    tpu.vector_store %arg9[%c40_79, %c0_80], %105 {strides = array<i32>} : memref<72x384xf32, #tpu.memory_space<vmem>>, vector<8x384xf32>,
    %107 = vector.extract_strided_slice %94 {offsets = [0, 36], sizes = [8, 384], strides = [1, 1]} : vector<8x422xf32> to vector<8x384xf32>
    %c48_81 = arith.constant 48 : index
    %c0_82 = arith.constant 0 : index
    %108 = vector.load %arg9[%c48_81, %c0_82] : memref<72x384xf32, #tpu.memory_space<vmem>>, vector<8x384xf32>
    tpu.vector_store %arg9[%c48_81, %c0_82], %107 {strides = array<i32>} : memref<72x384xf32, #tpu.memory_space<vmem>>, vector<8x384xf32>,
    %109 = vector.extract_strided_slice %94 {offsets = [0, 37], sizes = [8, 384], strides = [1, 1]} : vector<8x422xf32> to vector<8x384xf32>
    %c56_83 = arith.constant 56 : index
    %c0_84 = arith.constant 0 : index
    %110 = vector.load %arg9[%c56_83, %c0_84] : memref<72x384xf32, #tpu.memory_space<vmem>>, vector<8x384xf32>
    tpu.vector_store %arg9[%c56_83, %c0_84], %109 {strides = array<i32>} : memref<72x384xf32, #tpu.memory_space<vmem>>, vector<8x384xf32>,
    %111 = vector.extract_strided_slice %94 {offsets = [0, 38], sizes = [8, 384], strides = [1, 1]} : vector<8x422xf32> to vector<8x384xf32>
    %c64_85 = arith.constant 64 : index
    %c0_86 = arith.constant 0 : index
    %112 = vector.load %arg9[%c64_85, %c0_86] : memref<72x384xf32, #tpu.memory_space<vmem>>, vector<8x384xf32>
    tpu.vector_store %arg9[%c64_85, %c0_86], %111 {strides = array<i32>} : memref<72x384xf32, #tpu.memory_space<vmem>>, vector<8x384xf32>,
    %c0_87 = arith.constant 0 : index
    %c0_88 = arith.constant 0 : index
    %113 = vector.load %arg9[%c0_87, %c0_88] : memref<72x384xf32, #tpu.memory_space<vmem>>, vector<72x384xf32>
    %cst_89 = arith.constant dense<0.000000e+00> : vector<4x384xf32>
    %114 = tpu.matmul %1, %113, %cst_89 {dimension_numbers = #tpu.dot_dimension_numbers<[1], [0], [0], [1], [0, 0, 1, 1], [], []>} : vector<4x72xf32>, vector<72x384xf32>, vector<4x384xf32> -> vector<4x384xf32>
    %115 = vector.extract_strided_slice %66 {offsets = [0, 54], sizes = [4, 384], strides = [1, 1]} : vector<4x486xf32> to vector<4x384xf32>
    %116 = arith.addf %115, %114 : vector<4x384xf32>
    %117 = vector.broadcast %3 : vector<4x1xf32> to vector<4x384xf32>
    %118 = arith.addf %116, %117 : vector<4x384xf32>
    %119 = arith.index_cast %c1_i32 : i32 to index
    %c0_90 = arith.constant 0 : index
    %c0_91 = arith.constant 0 : index
    %120 = vector.load %arg7[%119, %c0_90, %c0_91] : memref<2x4x384xf32, #tpu.memory_space<vmem>>, vector<1x4x384xf32>
    %121 = vector.shape_cast %120 : vector<1x4x384xf32> to vector<4x384xf32>
    %122 = vector.shape_cast %118 : vector<4x384xf32> to vector<1x4x384xf32>
    tpu.vector_store %arg7[%119, %c0_90, %c0_91], %122 {strides = array<i32>} : memref<2x4x384xf32, #tpu.memory_space<vmem>>, vector<1x4x384xf32>,
    %c2_i32 = arith.constant 2 : i32
    return
  }
  func.func @transform_0(%arg0: i32) -> (i32, i32, i32) {
    %c0_i32 = arith.constant 0 : i32
    %c0_i32_0 = arith.constant 0 : i32
    %c0_i32_1 = arith.constant 0 : i32
    return %arg0, %c0_i32, %c0_i32_0 : i32, i32, i32
  }
  func.func @transform_1(%arg0: i32) -> (i32, i32) {
    %c0_i32 = arith.constant 0 : i32
    %c0_i32_0 = arith.constant 0 : i32
    %c0_i32_1 = arith.constant 0 : i32
    return %c0_i32, %c0_i32_0 : i32, i32
  }
  func.func @transform_2(%arg0: i32) -> (i32, i32) {
    %c0_i32 = arith.constant 0 : i32
    %c0_i32_0 = arith.constant 0 : i32
    %c0_i32_1 = arith.constant 0 : i32
    return %c0_i32, %c0_i32_0 : i32, i32
  }
  func.func @transform_3(%arg0: i32) -> (i32, i32) {
    %c0_i32 = arith.constant 0 : i32
    %c0_i32_0 = arith.constant 0 : i32
    %c0_i32_1 = arith.constant 0 : i32
    return %c0_i32, %c0_i32_0 : i32, i32
  }
  func.func @transform_4(%arg0: i32) -> (i32, i32) {
    %c0_i32 = arith.constant 0 : i32
    %c0_i32_0 = arith.constant 0 : i32
    %c0_i32_1 = arith.constant 0 : i32
    return %c0_i32, %c0_i32_0 : i32, i32
  }
  func.func @transform_5(%arg0: i32) -> (i32, i32) {
    %c0_i32 = arith.constant 0 : i32
    %c0_i32_0 = arith.constant 0 : i32
    %c0_i32_1 = arith.constant 0 : i32
    return %c0_i32, %c0_i32_0 : i32, i32
  }
  func.func @transform_6(%arg0: i32) -> (i32, i32, i32) {
    %c0_i32 = arith.constant 0 : i32
    %c0_i32_0 = arith.constant 0 : i32
    %c0_i32_1 = arith.constant 0 : i32
    return %arg0, %c0_i32, %c0_i32_0 : i32, i32, i32
  }
}

</mosaic_0001>

<llo_original>
// kernel: residual_block_forward.1
$region0: #{residual_block_forward.1}
  #allocation0 [shape = 'u32[]', space=smem, size = 0x4, offset = 0x4, fixed_abs, tag = 'smem constant byte address 0x4 - core index']
  #allocation1 [shape = 'u32[144,128]{1,0:T(1,128)}', space=vmem, size = 0x12000, scoped, tag = 'internal scratch']
  #allocation2 [shape = 'f32[36,422]{1,0:T(8,128)}', space=vmem, size = 0x14000, scoped, tag = 'scratch operand']
  #allocation3 [shape = 'f32[72,384]{1,0:T(8,128)}', space=vmem, size = 0x1b000, scoped, tag = 'scratch operand']
  %s0 = inlined_call_operand.vmem [shape: f32[2,4,486], index: 0, kind: input, shape index: {}]
  %s1 = inlined_call_operand.vmem [shape: f32[1,422], index: 1, kind: input, shape index: {}]
  %s2 = inlined_call_operand.vmem [shape: f32[8,36], index: 2, kind: input, shape index: {}]
  %s3 = inlined_call_operand.vmem [shape: f32[8,1], index: 3, kind: input, shape index: {}]
  %s4 = inlined_call_operand.vmem [shape: f32[4,72], index: 4, kind: input, shape index: {}]
  %s5 = inlined_call_operand.vmem [shape: f32[4,1], index: 5, kind: input, shape index: {}]
  %s6 = inlined_call_operand.vmem [shape: f32[2,4,384], index: 6, kind: output, shape index: {}]
  %s7 = sld [smem:[#allocation0]]
  $region34: #{residual_block_forward.1} parent=0
    _
  %s9 = ssub.s32 1, %s7
  %s10 = scalar_select 0, %s9, %s7
  // Predicated region
  $region2: #{residual_block_forward.1} parent=0 // pred_check
    _
  $region3: #{residual_block_forward.1} parent=0 // pred_check_branch
    %12 = sbr.rel (0) target = $region5
  $region4: #{residual_block_forward.1} parent=0 // pred_region
    _
  $region5: #{residual_block_forward.1} parent=0 // pred_fallthru
    _
  // Predicated region
  $region6: #{residual_block_forward.1} parent=0 // pred_check
    _
  $region7: #{residual_block_forward.1} parent=0 // pred_check_branch
    %14 = sbr.rel (0) target = $region9
  $region8: #{residual_block_forward.1} parent=0 // pred_region
    _
  $region9: #{residual_block_forward.1} parent=0 // pred_fallthru
    _
  // Predicated region
  $region10: #{residual_block_forward.1} parent=0 // pred_check
    _
  $region11: #{residual_block_forward.1} parent=0 // pred_check_branch
    %16 = sbr.rel (0) target = $region13
  $region12: #{residual_block_forward.1} parent=0 // pred_region
    _
  $region13: #{residual_block_forward.1} parent=0 // pred_fallthru
    _
  // Predicated region
  $region14: #{residual_block_forward.1} parent=0 // pred_check
    _
  $region15: #{residual_block_forward.1} parent=0 // pred_check_branch
    %18 = sbr.rel (0) target = $region17
  $region16: #{residual_block_forward.1} parent=0 // pred_region
    _
  $region17: #{residual_block_forward.1} parent=0 // pred_fallthru
    _
  // Predicated region
  $region18: #{residual_block_forward.1} parent=0 // pred_check
    _
  $region19: #{residual_block_forward.1} parent=0 // pred_check_branch
    %20 = sbr.rel (0) target = $region21
  $region20: #{residual_block_forward.1} parent=0 // pred_region
    _
  $region21: #{residual_block_forward.1} parent=0 // pred_fallthru
    _
  // Predicated region
  $region22: #{residual_block_forward.1} parent=0 // pred_check
    _
  $region23: #{residual_block_forward.1} parent=0 // pred_check_branch
    %22 = sbr.rel (0) target = $region25
  $region24: #{residual_block_forward.1} parent=0 // pred_region
    _
  $region25: #{residual_block_forward.1} parent=0 // pred_fallthru
    _
  %v23 = vld [vmem:[%s2] sm:$0xff]
  %v24 = vld [vmem:[%s4] sm:$0xf]
  %v25 = vld [vmem:[%s3] sm:$0xff]
  %v26 = vld [vmem:[%s5] sm:$0xf]
  %v27 = vld [vmem:[%s1] sm:$0xf]
  %v28 = vld [vmem:[%s0] sm:$0xff]
  %v29 = vld [vmem:[%s0 + $0x8] sm:$0xff]
  %v30 = vmax.f32 %v28, 0.0
  %v31 = vmax.f32 %v29, 0.0
  %v34 = vcombine.high %v30, %v30
  %v35 = vcombine.high %v31, %v31
  %36 = vrot.lane.b32.xlu0 %v30, 112
  %v37 = vpop.permute.xlu0 %36
  %38 = vrot.lane.b32.xlu0 %v34, 112
  %v39 = vpop.permute.xlu0 %38
  %40 = vrot.lane.b32.xlu0 %v31, 112
  %v41 = vpop.permute.xlu0 %40
  %42 = vrot.lane.b32.xlu0 %v35, 112
  %v43 = vpop.permute.xlu0 %42
  %vm44 = vcmask 916480
  %v45 = vsel %vm44, %v37, %v39
  %v46 = vsel %vm44, %v39, %v41
  %v47 = vsel %vm44, %v41, %v43
  %52 = vst [vmem:[#allocation2] sm:$0xf] %v45
  %53 = vst [vmem:[#allocation2 + $0x8] sm:$0xf] %v46
  %54 = vst [vmem:[#allocation2 + $0x10] sm:$0xf] %v47
  %vm55 = vcmask 306176
  %56 = vst.msk [vmem:[#allocation2 + $0x18] sm:$0xf] %vm55, %v43
  %v57 = vcombine.low %v30, %v30
  %v58 = vcombine.low %v31, %v31
  %59 = vrot.lane.b32.xlu0 %v57, 111
  %v60 = vpop.permute.xlu0 %59
  %61 = vrot.lane.b32.xlu0 %v30, 111
  %v62 = vpop.permute.xlu0 %61
  %63 = vrot.lane.b32.xlu0 %v58, 111
  %v64 = vpop.permute.xlu0 %63
  %65 = vrot.lane.b32.xlu0 %v31, 111
  %v66 = vpop.permute.xlu0 %65
  %vm67 = vcmask 908288
  %v68 = vsel %vm67, %v60, %v62
  %v69 = vsel %vm67, %v62, %v64
  %v70 = vsel %vm67, %v64, %v66
  %75 = vst [vmem:[#allocation2] sm:$0xf0] %v68
  %76 = vst [vmem:[#allocation2 + $0x8] sm:$0xf0] %v69
  %77 = vst [vmem:[#allocation2 + $0x10] sm:$0xf0] %v70
  %vm78 = vcmask 310276
  %79 = vst.msk [vmem:[#allocation2 + $0x18] sm:$0xf0] %vm78, %v66
  %80 = vrot.lane.b32.xlu0 %v30, 110
  %v81 = vpop.permute.xlu0 %80
  %82 = vrot.lane.b32.xlu0 %v34, 110
  %v83 = vpop.permute.xlu0 %82
  %84 = vrot.lane.b32.xlu0 %v31, 110
  %v85 = vpop.permute.xlu0 %84
  %86 = vrot.lane.b32.xlu0 %v35, 110
  %v87 = vpop.permute.xlu0 %86
  %vm88 = vcmask 900096
  %v89 = vsel %vm88, %v81, %v83
  %v90 = vsel %vm88, %v83, %v85
  %v91 = vsel %vm88, %v85, %v87
  %96 = vst [vmem:[#allocation2 + $0x20] sm:$0xf] %v89
  %97 = vst [vmem:[#allocation2 + $0x28] sm:$0xf] %v90
  %98 = vst [vmem:[#allocation2 + $0x30] sm:$0xf] %v91
  %99 = vst.msk [vmem:[#allocation2 + $0x38] sm:$0xf] %vm55, %v87
  %100 = vrot.lane.b32.xlu0 %v57, 94
  %v101 = vpop.permute.xlu0 %100
  %102 = vrot.lane.b32.xlu0 %v30, 94
  %v103 = vpop.permute.xlu0 %102
  %104 = vrot.lane.b32.xlu0 %v58, 94
  %v105 = vpop.permute.xlu0 %104
  %106 = vrot.lane.b32.xlu0 %v31, 94
  %v107 = vpop.permute.xlu0 %106
  %vm108 = vcmask 769024
  %v109 = vsel %vm108, %v101, %v103
  %v110 = vsel %vm108, %v103, %v105
  %v111 = vsel %vm108, %v105, %v107
  %116 = vst [vmem:[#allocation2 + $0x20] sm:$0xf0] %v109
  %117 = vst [vmem:[#allocation2 + $0x28] sm:$0xf0] %v110
  %118 = vst [vmem:[#allocation2 + $0x30] sm:$0xf0] %v111
  %119 = vst.msk [vmem:[#allocation2 + $0x38] sm:$0xf0] %vm78, %v107
  %120 = vrot.lane.b32.xlu0 %v30, 93
  %v121 = vpop.permute.xlu0 %120
  %122 = vrot.lane.b32.xlu0 %v34, 93
  %v123 = vpop.permute.xlu0 %122
  %124 = vrot.lane.b32.xlu0 %v31, 93
  %v125 = vpop.permute.xlu0 %124
  %126 = vrot.lane.b32.xlu0 %v35, 93
  %v127 = vpop.permute.xlu0 %126
  %vm128 = vcmask 760832
  %v129 = vsel %vm128, %v121, %v123
  %v130 = vsel %vm128, %v123, %v125
  %v131 = vsel %vm128, %v125, %v127
  %136 = vst [vmem:[#allocation2 + $0x40] sm:$0xf] %v129
  %137 = vst [vmem:[#allocation2 + $0x48] sm:$0xf] %v130
  %138 = vst [vmem:[#allocation2 + $0x50] sm:$0xf] %v131
  %139 = vst.msk [vmem:[#allocation2 + $0x58] sm:$0xf] %vm55, %v127
  %140 = vrot.lane.b32.xlu0 %v57, 92
  %v141 = vpop.permute.xlu0 %140
  %142 = vrot.lane.b32.xlu0 %v30, 92
  %v143 = vpop.permute.xlu0 %142
  %144 = vrot.lane.b32.xlu0 %v58, 92
  %v145 = vpop.permute.xlu0 %144
  %146 = vrot.lane.b32.xlu0 %v31, 92
  %v147 = vpop.permute.xlu0 %146
  %vm148 = vcmask 752640
  %v149 = vsel %vm148, %v141, %v143
  %v150 = vsel %vm148, %v143, %v145
  %v151 = vsel %vm148, %v145, %v147
  %156 = vst [vmem:[#allocation2 + $0x40] sm:$0xf0] %v149
  %157 = vst [vmem:[#allocation2 + $0x48] sm:$0xf0] %v150
  %158 = vst [vmem:[#allocation2 + $0x50] sm:$0xf0] %v151
  %159 = vst.msk [vmem:[#allocation2 + $0x58] sm:$0xf0] %vm78, %v147
  %160 = vrot.lane.b32.xlu0 %v30, 76
  %v161 = vpop.permute.xlu0 %160
  %162 = vrot.lane.b32.xlu0 %v34, 76
  %v163 = vpop.permute.xlu0 %162
  %164 = vrot.lane.b32.xlu0 %v31, 76
  %v165 = vpop.permute.xlu0 %164
  %166 = vrot.lane.b32.xlu0 %v35, 76
  %v167 = vpop.permute.xlu0 %166
  %vm168 = vcmask 621568
  %v169 = vsel %vm168, %v161, %v163
  %v170 = vsel %vm168, %v163, %v165
  %v171 = vsel %vm168, %v165, %v167
  %176 = vst [vmem:[#allocation2 + $0x60] sm:$0xf] %v169
  %177 = vst [vmem:[#allocation2 + $0x68] sm:$0xf] %v170
  %178 = vst [vmem:[#allocation2 + $0x70] sm:$0xf] %v171
  %179 = vst.msk [vmem:[#allocation2 + $0x78] sm:$0xf] %vm55, %v167
  %180 = vrot.lane.b32.xlu0 %v57, 75
  %v181 = vpop.permute.xlu0 %180
  %182 = vrot.lane.b32.xlu0 %v30, 75
  %v183 = vpop.permute.xlu0 %182
  %184 = vrot.lane.b32.xlu0 %v58, 75
  %v185 = vpop.permute.xlu0 %184
  %186 = vrot.lane.b32.xlu0 %v31, 75
  %v187 = vpop.permute.xlu0 %186
  %vm188 = vcmask 613376
  %v189 = vsel %vm188, %v181, %v183
  %v190 = vsel %vm188, %v183, %v185
  %v191 = vsel %vm188, %v185, %v187
  %196 = vst [vmem:[#allocation2 + $0x60] sm:$0xf0] %v189
  %197 = vst [vmem:[#allocation2 + $0x68] sm:$0xf0] %v190
  %198 = vst [vmem:[#allocation2 + $0x70] sm:$0xf0] %v191
  %199 = vst.msk [vmem:[#allocation2 + $0x78] sm:$0xf0] %vm78, %v187
  %200 = vrot.lane.b32.xlu0 %v30, 74
  %v201 = vpop.permute.xlu0 %200
  %202 = vrot.lane.b32.xlu0 %v34, 74
  %v203 = vpop.permute.xlu0 %202
  %204 = vrot.lane.b32.xlu0 %v31, 74
  %v205 = vpop.permute.xlu0 %204
  %206 = vrot.lane.b32.xlu0 %v35, 74
  %v207 = vpop.permute.xlu0 %206
  %vm208 = vcmask 605184
  %v209 = vsel %vm208, %v201, %v203
  %v210 = vsel %vm208, %v203, %v205
  %v211 = vsel %vm208, %v205, %v207
  %216 = vst [vmem:[#allocation2 + $0x80] sm:$0xf] %v209
  %217 = vst [vmem:[#allocation2 + $0x88] sm:$0xf] %v210
  %218 = vst [vmem:[#allocation2 + $0x90] sm:$0xf] %v211
  %219 = vst.msk [vmem:[#allocation2 + $0x98] sm:$0xf] %vm55, %v207
  %v220 = vld [vmem:[#allocation2] sm:$0xff]
  %v221 = vld [vmem:[#allocation2 + $0x8] sm:$0xff]
  %v222 = vld [vmem:[#allocation2 + $0x10] sm:$0xff]
  %v223 = vld [vmem:[#allocation2 + $0x18] sm:$0xff]
  %v224 = vld [vmem:[#allocation2 + $0x20] sm:$0xff]
  %v225 = vld [vmem:[#allocation2 + $0x28] sm:$0xff]
  %v226 = vld [vmem:[#allocation2 + $0x30] sm:$0xff]
  %v227 = vld [vmem:[#allocation2 + $0x38] sm:$0xff]
  %v228 = vld [vmem:[#allocation2 + $0x40] sm:$0xff]
  %v229 = vld [vmem:[#allocation2 + $0x48] sm:$0xff]
  %v230 = vld [vmem:[#allocation2 + $0x50] sm:$0xff]
  %v231 = vld [vmem:[#allocation2 + $0x58] sm:$0xff]
  %v232 = vld [vmem:[#allocation2 + $0x60] sm:$0xff]
  %v233 = vld [vmem:[#allocation2 + $0x68] sm:$0xff]
  %v234 = vld [vmem:[#allocation2 + $0x70] sm:$0xff]
  %v235 = vld [vmem:[#allocation2 + $0x78] sm:$0xff]
  %v236 = vld [vmem:[#allocation2 + $0x80] sm:$0xf]
  %v237 = vld [vmem:[#allocation2 + $0x88] sm:$0xf]
  %v238 = vld [vmem:[#allocation2 + $0x90] sm:$0xf]
  %v239 = vld [vmem:[#allocation2 + $0x98] sm:$0xf]
  %241 = vset.pattern.permute.xlu0 0
  %242 = vperm.xlu0 %241, %v25
  %v243 = vpop.permute.xlu0 %242
  %vm245 = vcmask 293888
  %v247 = vsel %vm245, %v23, 0
  %vm249 = vcmask 1043456
  %v251 = vsel %vm249, %v236, 0
  %v254 = vsel %vm249, %v237, 0
  %v257 = vsel %vm249, %v238, 0
  %v260 = vsel %vm249, %v239, 0
  %262 = vmatprep.subr.mxu0 0.0
  %263 = vmatpush1.msra.mxu0 0.0
  %264 = vmatprep.subr.mxu0 0.0
  %265 = vmatpush1.msra.mxu0 0.0
  %266 = vmatprep.subr.mxu0 0.0
  %267 = vmatpush1.msra.mxu0 0.0
  %268 = vmatprep.subr.mxu0 0.0
  %269 = vmatpush1.msra.mxu0 0.0
  %270 = vmatprep.subr.mxu0 0.0
  %271 = vmatpush1.msra.mxu0 0.0
  %272 = vmatprep.subr.mxu0 0.0
  %273 = vmatpush1.msra.mxu0 0.0
  %274 = vmatprep.subr.mxu0 0.0
  %275 = vmatpush1.msra.mxu0 0.0
  %276 = vmatprep.subr.mxu0 0.0
  %277 = vmatpush1.msra.mxu0 0.0
  %278 = vmatprep.subr.mxu0 0.0
  %279 = vmatpush1.msra.mxu0 0.0
  %280 = vmatprep.subr.mxu0 0.0
  %281 = vmatpush1.msra.mxu0 0.0
  %282 = vmatprep.subr.mxu0 0.0
  %283 = vmatpush1.msra.mxu0 0.0
  %284 = vmatprep.subr.mxu0 %v254
  %285 = vmatpush1.msra.mxu0 %v251
  %286 = vmatprep.subr.mxu0 %v233
  %287 = vmatpush1.msra.mxu0 %v232
  %288 = vmatprep.subr.mxu0 %v229
  %289 = vmatpush1.msra.mxu0 %v228
  %290 = vmatprep.subr.mxu0 %v225
  %291 = vmatpush1.msra.mxu0 %v224
  %292 = vmatprep.subr.mxu0 %v221
  %293 = vmatpush1.msra.mxu0 %v220
  %294 = vmatprep.subr.mxu0 0.0
  %295 = vmatpush2.msra.mxu0 0.0
  %296 = vmatprep.subr.mxu0 0.0
  %297 = vmatpush2.msra.mxu0 0.0
  %298 = vmatprep.subr.mxu0 0.0
  %299 = vmatpush2.msra.mxu0 0.0
  %300 = vmatprep.subr.mxu0 0.0
  %301 = vmatpush2.msra.mxu0 0.0
  %302 = vmatprep.subr.mxu0 0.0
  %303 = vmatpush2.msra.mxu0 0.0
  %304 = vmatprep.subr.mxu0 0.0
  %305 = vmatpush2.msra.mxu0 0.0
  %306 = vmatprep.subr.mxu0 0.0
  %307 = vmatpush2.msra.mxu0 0.0
  %308 = vmatprep.subr.mxu0 0.0
  %309 = vmatpush2.msra.mxu0 0.0
  %310 = vmatprep.subr.mxu0 0.0
  %311 = vmatpush2.msra.mxu0 0.0
  %312 = vmatprep.subr.mxu0 0.0
  %313 = vmatpush2.msra.mxu0 0.0
  %314 = vmatprep.subr.mxu0 0.0
  %315 = vmatpush2.msra.mxu0 0.0
  %316 = vmatprep.subr.mxu0 0.0
  %317 = vmatpush2.msra.mxu0 0.0
  %318 = vmatprep.subr.mxu0 0.0
  %319 = vmatpush2.msra.mxu0 0.0
  %320 = vmatprep.subr.mxu0 0.0
  %321 = vmatpush2.msra.mxu0 0.0
  %322 = vmatprep.subr.mxu0 0.0
  %323 = vmatpush2.msra.mxu0 0.0
  %324 = vmatprep.subr.mxu0 0.0
  %325 = vmatpush2.msra.mxu0 0.0
  %326 = vmatprep.mubr.f32.mxu0 0.0
  %327 = vmatmul.mubr.f32.gmra.mxu0 %v247
  %v328 = vpop.f32.mrf.mxu0
  %v329 = vadd.f32 %v243, %v328
  %v330 = vpop.f32.mrf.mxu0
  %v331 = vadd.f32 %v243, %v330
  %332 = vdwg.mxu0
  %333 = vmatprep.subr.mxu0 0.0
  %334 = vmatpush1.msra.mxu0 0.0
  %335 = vmatprep.subr.mxu0 0.0
  %336 = vmatpush1.msra.mxu0 0.0
  %337 = vmatprep.subr.mxu0 0.0
  %338 = vmatpush1.msra.mxu0 0.0
  %339 = vmatprep.subr.mxu0 0.0
  %340 = vmatpush1.msra.mxu0 0.0
  %341 = vmatprep.subr.mxu0 0.0
  %342 = vmatpush1.msra.mxu0 0.0
  %343 = vmatprep.subr.mxu0 0.0
  %344 = vmatpush1.msra.mxu0 0.0
  %345 = vmatprep.subr.mxu0 0.0
  %346 = vmatpush1.msra.mxu0 0.0
  %347 = vmatprep.subr.mxu0 0.0
  %348 = vmatpush1.msra.mxu0 0.0
  %349 = vmatprep.subr.mxu0 0.0
  %350 = vmatpush1.msra.mxu0 0.0
  %351 = vmatprep.subr.mxu0 0.0
  %352 = vmatpush1.msra.mxu0 0.0
  %353 = vmatprep.subr.mxu0 0.0
  %354 = vmatpush1.msra.mxu0 0.0
  %355 = vmatprep.subr.mxu0 %v260
  %356 = vmatpush1.msra.mxu0 %v257
  %357 = vmatprep.subr.mxu0 %v235
  %358 = vmatpush1.msra.mxu0 %v234
  %359 = vmatprep.subr.mxu0 %v231
  %360 = vmatpush1.msra.mxu0 %v230
  %361 = vmatprep.subr.mxu0 %v227
  %362 = vmatpush1.msra.mxu0 %v226
  %363 = vmatprep.subr.mxu0 %v223
  %364 = vmatpush1.msra.mxu0 %v222
  %365 = vmatprep.subr.mxu0 0.0
  %366 = vmatpush2.msra.mxu0 0.0
  %367 = vmatprep.subr.mxu0 0.0
  %368 = vmatpush2.msra.mxu0 0.0
  %369 = vmatprep.subr.mxu0 0.0
  %370 = vmatpush2.msra.mxu0 0.0
  %371 = vmatprep.subr.mxu0 0.0
  %372 = vmatpush2.msra.mxu0 0.0
  %373 = vmatprep.subr.mxu0 0.0
  %374 = vmatpush2.msra.mxu0 0.0
  %375 = vmatprep.subr.mxu0 0.0
  %376 = vmatpush2.msra.mxu0 0.0
  %377 = vmatprep.subr.mxu0 0.0
  %378 = vmatpush2.msra.mxu0 0.0
  %379 = vmatprep.subr.mxu0 0.0
  %380 = vmatpush2.msra.mxu0 0.0
  %381 = vmatprep.subr.mxu0 0.0
  %382 = vmatpush2.msra.mxu0 0.0
  %383 = vmatprep.subr.mxu0 0.0
  %384 = vmatpush2.msra.mxu0 0.0
  %385 = vmatprep.subr.mxu0 0.0
  %386 = vmatpush2.msra.mxu0 0.0
  %387 = vmatprep.subr.mxu0 0.0
  %388 = vmatpush2.msra.mxu0 0.0
  %389 = vmatprep.subr.mxu0 0.0
  %390 = vmatpush2.msra.mxu0 0.0
  %391 = vmatprep.subr.mxu0 0.0
  %392 = vmatpush2.msra.mxu0 0.0
  %393 = vmatprep.subr.mxu0 0.0
  %394 = vmatpush2.msra.mxu0 0.0
  %395 = vmatprep.subr.mxu0 0.0
  %396 = vmatpush2.msra.mxu0 0.0
  %397 = vmatprep.mubr.f32.mxu0 0.0
  %398 = vmatmul.mubr.f32.gmra.mxu0 %v247
  %v399 = vpop.f32.mrf.mxu0
  %v400 = vadd.f32 %v243, %v399
  %v401 = vpop.f32.mrf.mxu0
  %v402 = vadd.f32 %v243, %v401
  %403 = vdwg.mxu0
  %v404 = vmax.f32 %v329, 0.0
  %v405 = vmax.f32 %v331, 0.0
  %v406 = vmax.f32 %v400, 0.0
  %v407 = vmax.f32 %v402, 0.0
  %v409 = vlaneseq
  %v410 = vshrl.u32 %v409, 7
  %v411 = vsub.s32 0, %v410
  %v412 = vrot.slane %v27, %v411
  %v413 = vlaneseq
  %v414 = vshrl.u32 %v413, 7
  %v415 = vsub.s32 1, %v414
  %v416 = vrot.slane %v27, %v415
  %v417 = vlaneseq
  %v418 = vshrl.u32 %v417, 7
  %v419 = vsub.s32 2, %v418
  %v420 = vrot.slane %v27, %v419
  %v421 = vlaneseq
  %v422 = vshrl.u32 %v421, 7
  %v423 = vsub.s32 3, %v422
  %v424 = vrot.slane %v27, %v423
  %v429 = vmul.f32 %v404, %v412
  %v430 = vmul.f32 %v405, %v416
  %v431 = vmul.f32 %v406, %v420
  %v432 = vmul.f32 %v407, %v424
  %433 = vst [vmem:[#allocation3] sm:$0xff] %v429
  %434 = vst [vmem:[#allocation3 + $0x8] sm:$0xff] %v430
  %435 = vst [vmem:[#allocation3 + $0x10] sm:$0xff] %v431
  %440 = vrot.lane.b32.xlu0 %v429, 127
  %v441 = vpop.permute.xlu0 %440
  %442 = vrot.lane.b32.xlu0 %v430, 127
  %v443 = vpop.permute.xlu0 %442
  %444 = vrot.lane.b32.xlu0 %v431, 127
  %v445 = vpop.permute.xlu0 %444
  %446 = vrot.lane.b32.xlu0 %v432, 127
  %v447 = vpop.permute.xlu0 %446
  %vm448 = vcmask 1039360
  %v449 = vsel %vm448, %v441, %v443
  %v450 = vsel %vm448, %v443, %v445
  %v451 = vsel %vm448, %v445, %v447
  %455 = vst [vmem:[#allocation3 + $0x18] sm:$0xff] %v449
  %456 = vst [vmem:[#allocation3 + $0x20] sm:$0xff] %v450
  %457 = vst [vmem:[#allocation3 + $0x28] sm:$0xff] %v451
  %458 = vrot.lane.b32.xlu0 %v429, 126
  %v459 = vpop.permute.xlu0 %458
  %460 = vrot.lane.b32.xlu0 %v430, 126
  %v461 = vpop.permute.xlu0 %460
  %462 = vrot.lane.b32.xlu0 %v431, 126
  %v463 = vpop.permute.xlu0 %462
  %464 = vrot.lane.b32.xlu0 %v432, 126
  %v465 = vpop.permute.xlu0 %464
  %vm466 = vcmask 1031168
  %v467 = vsel %vm466, %v459, %v461
  %v468 = vsel %vm466, %v461, %v463
  %v469 = vsel %vm466, %v463, %v465
  %473 = vst [vmem:[#allocation3 + $0x30] sm:$0xff] %v467
  %474 = vst [vmem:[#allocation3 + $0x38] sm:$0xff] %v468
  %475 = vst [vmem:[#allocation3 + $0x40] sm:$0xff] %v469
  %476 = vrot.lane.b32.xlu0 %v429, 110
  %v477 = vpop.permute.xlu0 %476
  %478 = vrot.lane.b32.xlu0 %v430, 110
  %v479 = vpop.permute.xlu0 %478
  %480 = vrot.lane.b32.xlu0 %v431, 110
  %v481 = vpop.permute.xlu0 %480
  %482 = vrot.lane.b32.xlu0 %v432, 110
  %v483 = vpop.permute.xlu0 %482
  %v484 = vsel %vm88, %v477, %v479
  %v485 = vsel %vm88, %v479, %v481
  %v486 = vsel %vm88, %v481, %v483
  %490 = vst [vmem:[#allocation3 + $0x48] sm:$0xff] %v484
  %491 = vst [vmem:[#allocation3 + $0x50] sm:$0xff] %v485
  %492 = vst [vmem:[#allocation3 + $0x58] sm:$0xff] %v486
  %493 = vrot.lane.b32.xlu0 %v429, 109
  %v494 = vpop.permute.xlu0 %493
  %495 = vrot.lane.b32.xlu0 %v430, 109
  %v496 = vpop.permute.xlu0 %495
  %497 = vrot.lane.b32.xlu0 %v431, 109
  %v498 = vpop.permute.xlu0 %497
  %499 = vrot.lane.b32.xlu0 %v432, 109
  %v500 = vpop.permute.xlu0 %499
  %vm501 = vcmask 891904
  %v502 = vsel %vm501, %v494, %v496
  %v503 = vsel %vm501, %v496, %v498
  %v504 = vsel %vm501, %v498, %v500
  %508 = vst [vmem:[#allocation3 + $0x60] sm:$0xff] %v502
  %509 = vst [vmem:[#allocation3 + $0x68] sm:$0xff] %v503
  %510 = vst [vmem:[#allocation3 + $0x70] sm:$0xff] %v504
  %511 = vrot.lane.b32.xlu0 %v429, 108
  %v512 = vpop.permute.xlu0 %511
  %513 = vrot.lane.b32.xlu0 %v430, 108
  %v514 = vpop.permute.xlu0 %513
  %515 = vrot.lane.b32.xlu0 %v431, 108
  %v516 = vpop.permute.xlu0 %515
  %517 = vrot.lane.b32.xlu0 %v432, 108
  %v518 = vpop.permute.xlu0 %517
  %vm519 = vcmask 883712
  %v520 = vsel %vm519, %v512, %v514
  %v521 = vsel %vm519, %v514, %v516
  %v522 = vsel %vm519, %v516, %v518
  %526 = vst [vmem:[#allocation3 + $0x78] sm:$0xff] %v520
  %527 = vst [vmem:[#allocation3 + $0x80] sm:$0xff] %v521
  %528 = vst [vmem:[#allocation3 + $0x88] sm:$0xff] %v522
  %529 = vrot.lane.b32.xlu0 %v429, 92
  %v530 = vpop.permute.xlu0 %529
  %531 = vrot.lane.b32.xlu0 %v430, 92
  %v532 = vpop.permute.xlu0 %531
  %533 = vrot.lane.b32.xlu0 %v431, 92
  %v534 = vpop.permute.xlu0 %533
  %535 = vrot.lane.b32.xlu0 %v432, 92
  %v536 = vpop.permute.xlu0 %535
  %v537 = vsel %vm148, %v530, %v532
  %v538 = vsel %vm148, %v532, %v534
  %v539 = vsel %vm148, %v534, %v536
  %543 = vst [vmem:[#allocation3 + $0x90] sm:$0xff] %v537
  %544 = vst [vmem:[#allocation3 + $0x98] sm:$0xff] %v538
  %545 = vst [vmem:[#allocation3 + $0xa0] sm:$0xff] %v539
  %546 = vrot.lane.b32.xlu0 %v429, 91
  %v547 = vpop.permute.xlu0 %546
  %548 = vrot.lane.b32.xlu0 %v430, 91
  %v549 = vpop.permute.xlu0 %548
  %550 = vrot.lane.b32.xlu0 %v431, 91
  %v551 = vpop.permute.xlu0 %550
  %552 = vrot.lane.b32.xlu0 %v432, 91
  %v553 = vpop.permute.xlu0 %552
  %vm554 = vcmask 744448
  %v555 = vsel %vm554, %v547, %v549
  %v556 = vsel %vm554, %v549, %v551
  %v557 = vsel %vm554, %v551, %v553
  %561 = vst [vmem:[#allocation3 + $0xa8] sm:$0xff] %v555
  %562 = vst [vmem:[#allocation3 + $0xb0] sm:$0xff] %v556
  %563 = vst [vmem:[#allocation3 + $0xb8] sm:$0xff] %v557
  %564 = vrot.lane.b32.xlu0 %v429, 90
  %v565 = vpop.permute.xlu0 %564
  %566 = vrot.lane.b32.xlu0 %v430, 90
  %v567 = vpop.permute.xlu0 %566
  %568 = vrot.lane.b32.xlu0 %v431, 90
  %v569 = vpop.permute.xlu0 %568
  %570 = vrot.lane.b32.xlu0 %v432, 90
  %v571 = vpop.permute.xlu0 %570
  %vm572 = vcmask 736256
  %v573 = vsel %vm572, %v565, %v567
  %v574 = vsel %vm572, %v567, %v569
  %v575 = vsel %vm572, %v569, %v571
  %579 = vst [vmem:[#allocation3 + $0xc0] sm:$0xff] %v573
  %580 = vst [vmem:[#allocation3 + $0xc8] sm:$0xff] %v574
  %581 = vst [vmem:[#allocation3 + $0xd0] sm:$0xff] %v575
  %v582 = vld [vmem:[#allocation3] sm:$0xff]
  %v583 = vld [vmem:[#allocation3 + $0x8] sm:$0xff]
  %v584 = vld [vmem:[#allocation3 + $0x10] sm:$0xff]
  %v585 = vld [vmem:[#allocation3 + $0x18] sm:$0xff]
  %v586 = vld [vmem:[#allocation3 + $0x20] sm:$0xff]
  %v587 = vld [vmem:[#allocation3 + $0x28] sm:$0xff]
  %v588 = vld [vmem:[#allocation3 + $0x30] sm:$0xff]
  %v589 = vld [vmem:[#allocation3 + $0x38] sm:$0xff]
  %v590 = vld [vmem:[#allocation3 + $0x40] sm:$0xff]
  %v591 = vld [vmem:[#allocation3 + $0x48] sm:$0xff]
  %v592 = vld [vmem:[#allocation3 + $0x50] sm:$0xff]
  %v593 = vld [vmem:[#allocation3 + $0x58] sm:$0xff]
  %v594 = vld [vmem:[#allocation3 + $0x60] sm:$0xff]
  %v595 = vld [vmem:[#allocation3 + $0x68] sm:$0xff]
  %v596 = vld [vmem:[#allocation3 + $0x70] sm:$0xff]
  %v597 = vld [vmem:[#allocation3 + $0x78] sm:$0xff]
  %v598 = vld [vmem:[#allocation3 + $0x80] sm:$0xff]
  %v599 = vld [vmem:[#allocation3 + $0x88] sm:$0xff]
  %v600 = vld [vmem:[#allocation3 + $0x90] sm:$0xff]
  %v601 = vld [vmem:[#allocation3 + $0x98] sm:$0xff]
  %v602 = vld [vmem:[#allocation3 + $0xa0] sm:$0xff]
  %v603 = vld [vmem:[#allocation3 + $0xa8] sm:$0xff]
  %v604 = vld [vmem:[#allocation3 + $0xb0] sm:$0xff]
  %v605 = vld [vmem:[#allocation3 + $0xb8] sm:$0xff]
  %v606 = vld [vmem:[#allocation3 + $0xc0] sm:$0xff]
  %v607 = vld [vmem:[#allocation3 + $0xc8] sm:$0xff]
  %v608 = vld [vmem:[#allocation3 + $0xd0] sm:$0xff]
  %vm609 = vcmask 588800
  %v611 = vsel %vm609, %v24, 0
  %613 = vmatprep.subr.mxu0 0.0
  %614 = vmatpush1.msra.mxu0 0.0
  %615 = vmatprep.subr.mxu0 0.0
  %616 = vmatpush1.msra.mxu0 0.0
  %617 = vmatprep.subr.mxu0 0.0
  %618 = vmatpush1.msra.mxu0 0.0
  %619 = vmatprep.subr.mxu0 0.0
  %620 = vmatpush1.msra.mxu0 0.0
  %621 = vmatprep.subr.mxu0 0.0
  %622 = vmatpush1.msra.mxu0 0.0
  %623 = vmatprep.subr.mxu0 0.0
  %624 = vmatpush1.msra.mxu0 0.0
  %625 = vmatprep.subr.mxu0 0.0
  %626 = vmatpush1.msra.mxu0 0.0
  %627 = vmatprep.subr.mxu0 %v607
  %628 = vmatpush1.msra.mxu0 %v606
  %629 = vmatprep.subr.mxu0 %v604
  %630 = vmatpush1.msra.mxu0 %v603
  %631 = vmatprep.subr.mxu0 %v601
  %632 = vmatpush1.msra.mxu0 %v600
  %633 = vmatprep.subr.mxu0 %v598
  %634 = vmatpush1.msra.mxu0 %v597
  %635 = vmatprep.subr.mxu0 %v595
  %636 = vmatpush1.msra.mxu0 %v594
  %637 = vmatprep.subr.mxu0 %v592
  %638 = vmatpush1.msra.mxu0 %v591
  %639 = vmatprep.subr.mxu0 %v589
  %640 = vmatpush1.msra.mxu0 %v588
  %641 = vmatprep.subr.mxu0 %v586
  %642 = vmatpush1.msra.mxu0 %v585
  %643 = vmatprep.subr.mxu0 %v583
  %644 = vmatpush1.msra.mxu0 %v582
  %645 = vmatprep.subr.mxu0 0.0
  %646 = vmatpush2.msra.mxu0 0.0
  %647 = vmatprep.subr.mxu0 0.0
  %648 = vmatpush2.msra.mxu0 0.0
  %649 = vmatprep.subr.mxu0 0.0
  %650 = vmatpush2.msra.mxu0 0.0
  %651 = vmatprep.subr.mxu0 0.0
  %652 = vmatpush2.msra.mxu0 0.0
  %653 = vmatprep.subr.mxu0 0.0
  %654 = vmatpush2.msra.mxu0 0.0
  %655 = vmatprep.subr.mxu0 0.0
  %656 = vmatpush2.msra.mxu0 0.0
  %657 = vmatprep.subr.mxu0 0.0
  %658 = vmatpush2.msra.mxu0 0.0
  %659 = vmatprep.subr.mxu0 0.0
  %660 = vmatpush2.msra.mxu0 0.0
  %661 = vmatprep.subr.mxu0 0.0
  %662 = vmatpush2.msra.mxu0 0.0
  %663 = vmatprep.subr.mxu0 0.0
  %664 = vmatpush2.msra.mxu0 0.0
  %665 = vmatprep.subr.mxu0 0.0
  %666 = vmatpush2.msra.mxu0 0.0
  %667 = vmatprep.subr.mxu0 0.0
  %668 = vmatpush2.msra.mxu0 0.0
  %669 = vmatprep.subr.mxu0 0.0
  %670 = vmatpush2.msra.mxu0 0.0
  %671 = vmatprep.subr.mxu0 0.0
  %672 = vmatpush2.msra.mxu0 0.0
  %673 = vmatprep.subr.mxu0 0.0
  %674 = vmatpush2.msra.mxu0 0.0
  %675 = vmatprep.subr.mxu0 0.0
  %676 = vmatpush2.msra.mxu0 0.0
  %677 = vmatprep.mubr.f32.mxu0 0.0
  %678 = vmatmul.mubr.f32.gmra.mxu0 %v611
  %v679 = vpop.f32.mrf.mxu0
  %v680 = vadd.f32 0.0, %v679
  %v681 = vpop.f32.mrf.mxu0
  %v682 = vadd.f32 0.0, %v681
  %683 = vdwg.mxu0
  %684 = vmatprep.subr.mxu0 0.0
  %685 = vmatpush1.msra.mxu0 0.0
  %686 = vmatprep.subr.mxu0 0.0
  %687 = vmatpush1.msra.mxu0 0.0
  %688 = vmatprep.subr.mxu0 0.0
  %689 = vmatpush1.msra.mxu0 0.0
  %690 = vmatprep.subr.mxu0 0.0
  %691 = vmatpush1.msra.mxu0 0.0
  %692 = vmatprep.subr.mxu0 0.0
  %693 = vmatpush1.msra.mxu0 0.0
  %694 = vmatprep.subr.mxu0 0.0
  %695 = vmatpush1.msra.mxu0 0.0
  %696 = vmatprep.subr.mxu0 0.0
  %697 = vmatpush1.msra.mxu0 0.0
  %698 = vmatprep.subr.mxu0 0.0
  %699 = vmatpush1.msra.mxu0 %v608
  %700 = vmatprep.subr.mxu0 0.0
  %701 = vmatpush1.msra.mxu0 %v605
  %702 = vmatprep.subr.mxu0 0.0
  %703 = vmatpush1.msra.mxu0 %v602
  %704 = vmatprep.subr.mxu0 0.0
  %705 = vmatpush1.msra.mxu0 %v599
  %706 = vmatprep.subr.mxu0 0.0
  %707 = vmatpush1.msra.mxu0 %v596
  %708 = vmatprep.subr.mxu0 0.0
  %709 = vmatpush1.msra.mxu0 %v593
  %710 = vmatprep.subr.mxu0 0.0
  %711 = vmatpush1.msra.mxu0 %v590
  %712 = vmatprep.subr.mxu0 0.0
  %713 = vmatpush1.msra.mxu0 %v587
  %714 = vmatprep.subr.mxu0 0.0
  %715 = vmatpush1.msra.mxu0 %v584
  %716 = vmatprep.subr.mxu0 0.0
  %717 = vmatpush2.msra.mxu0 0.0
  %718 = vmatprep.subr.mxu0 0.0
  %719 = vmatpush2.msra.mxu0 0.0
  %720 = vmatprep.subr.mxu0 0.0
  %721 = vmatpush2.msra.mxu0 0.0
  %722 = vmatprep.subr.mxu0 0.0
  %723 = vmatpush2.msra.mxu0 0.0
  %724 = vmatprep.subr.mxu0 0.0
  %725 = vmatpush2.msra.mxu0 0.0
  %726 = vmatprep.subr.mxu0 0.0
  %727 = vmatpush2.msra.mxu0 0.0
  %728 = vmatprep.subr.mxu0 0.0
  %729 = vmatpush2.msra.mxu0 0.0
  %730 = vmatprep.subr.mxu0 0.0
  %731 = vmatpush2.msra.mxu0 0.0
  %732 = vmatprep.subr.mxu0 0.0
  %733 = vmatpush2.msra.mxu0 0.0
  %734 = vmatprep.subr.mxu0 0.0
  %735 = vmatpush2.msra.mxu0 0.0
  %736 = vmatprep.subr.mxu0 0.0
  %737 = vmatpush2.msra.mxu0 0.0
  %738 = vmatprep.subr.mxu0 0.0
  %739 = vmatpush2.msra.mxu0 0.0
  %740 = vmatprep.subr.mxu0 0.0
  %741 = vmatpush2.msra.mxu0 0.0
  %742 = vmatprep.subr.mxu0 0.0
  %743 = vmatpush2.msra.mxu0 0.0
  %744 = vmatprep.subr.mxu0 0.0
  %745 = vmatpush2.msra.mxu0 0.0
  %746 = vmatprep.subr.mxu0 0.0
  %747 = vmatpush2.msra.mxu0 0.0
  %748 = vmatprep.mubr.f32.mxu0 0.0
  %749 = vmatmul.mubr.f32.gmra.mxu0 %v611
  %v750 = vpop.f32.mrf.mxu0
  %v751 = vadd.f32 0.0, %v750
  %v752 = vpop.f32.mrf.mxu0
  %753 = vdwg.mxu0
  %v757 = vcombine.low %v680, %v682
  %758 = vrot.lane.b32.xlu0 %v757, 54
  %v759 = vpop.permute.xlu0 %758
  %760 = vrot.lane.b32.xlu0 %v751, 54
  %v761 = vpop.permute.xlu0 %760
  %v762 = vrot.slane %v759, 4
  %v763 = vrot.slane %v761, 4
  %vm764 = vcmask 441344
  %v765 = vsel %vm764, %v762, %v759
  %v766 = vsel %vm249, %v762, %v763
  %v767 = vsel %vm764, %v766, %v761
  %v770 = vadd.f32 %v28, %v765
  %v771 = vadd.f32 %v29, %v767
  %773 = vset.pattern.permute.xlu0 0
  %774 = vperm.xlu0 %773, %v26
  %v775 = vpop.permute.xlu0 %774
  %v777 = vunpack.c.l.s4 839922192
  %v778 = vunpack.c.0.s8 %v777
  %v779 = vlaneseq
  %v780 = vshrl.u32 %v779, 7
  %v781 = vsub.s32 %v778, %v780
  %v782 = vrot.slane %v775, %v781
  %v784 = vadd.f32 %v770, %v782
  %v785 = vadd.f32 %v771, %v782
  %788 = vrot.lane.b32.xlu0 %v784, 74
  %v789 = vpop.permute.xlu0 %788
  %790 = vrot.lane.b32.xlu0 %v785, 74
  %v791 = vpop.permute.xlu0 %790
  %v792 = vrot.slane %v789, 4
  %v793 = vrot.slane %v791, 4
  %v794 = vsel %vm249, %v792, %v793
  %v795 = vsel %vm208, %v789, %v794
  %v796 = vsel %vm208, %v791, %v793
  %799 = vst [vmem:[%s6] sm:$0xff] %v795
  %800 = vst [vmem:[%s6 + $0x8] sm:$0xf] %v796
  %s801 = scalar_lea.vmem %s0, 16
  %v802 = vld [vmem:[%s801] sm:$0xff]
  %v803 = vld [vmem:[%s801 + $0x8] sm:$0xff]
  %v804 = vmax.f32 %v802, 0.0
  %v805 = vmax.f32 %v803, 0.0
  %v808 = vcombine.high %v804, %v804
  %v809 = vcombine.high %v805, %v805
  %810 = vrot.lane.b32.xlu0 %v804, 112
  %v811 = vpop.permute.xlu0 %810
  %812 = vrot.lane.b32.xlu0 %v808, 112
  %v813 = vpop.permute.xlu0 %812
  %814 = vrot.lane.b32.xlu0 %v805, 112
  %v815 = vpop.permute.xlu0 %814
  %816 = vrot.lane.b32.xlu0 %v809, 112
  %v817 = vpop.permute.xlu0 %816
  %v818 = vsel %vm44, %v811, %v813
  %v819 = vsel %vm44, %v813, %v815
  %v820 = vsel %vm44, %v815, %v817
  %825 = vst [vmem:[#allocation2] sm:$0xf] %v818
  %826 = vst [vmem:[#allocation2 + $0x8] sm:$0xf] %v819
  %827 = vst [vmem:[#allocation2 + $0x10] sm:$0xf] %v820
  %828 = vst.msk [vmem:[#allocation2 + $0x18] sm:$0xf] %vm55, %v817
  %v829 = vcombine.low %v804, %v804
  %v830 = vcombine.low %v805, %v805
  %831 = vrot.lane.b32.xlu0 %v829, 111
  %v832 = vpop.permute.xlu0 %831
  %833 = vrot.lane.b32.xlu0 %v804, 111
  %v834 = vpop.permute.xlu0 %833
  %835 = vrot.lane.b32.xlu0 %v830, 111
  %v836 = vpop.permute.xlu0 %835
  %837 = vrot.lane.b32.xlu0 %v805, 111
  %v838 = vpop.permute.xlu0 %837
  %v839 = vsel %vm67, %v832, %v834
  %v840 = vsel %vm67, %v834, %v836
  %v841 = vsel %vm67, %v836, %v838
  %846 = vst [vmem:[#allocation2] sm:$0xf0] %v839
  %847 = vst [vmem:[#allocation2 + $0x8] sm:$0xf0] %v840
  %848 = vst [vmem:[#allocation2 + $0x10] sm:$0xf0] %v841
  %849 = vst.msk [vmem:[#allocation2 + $0x18] sm:$0xf0] %vm78, %v838
  %850 = vrot.lane.b32.xlu0 %v804, 110
  %v851 = vpop.permute.xlu0 %850
  %852 = vrot.lane.b32.xlu0 %v808, 110
  %v853 = vpop.permute.xlu0 %852
  %854 = vrot.lane.b32.xlu0 %v805, 110
  %v855 = vpop.permute.xlu0 %854
  %856 = vrot.lane.b32.xlu0 %v809, 110
  %v857 = vpop.permute.xlu0 %856
  %v858 = vsel %vm88, %v851, %v853
  %v859 = vsel %vm88, %v853, %v855
  %v860 = vsel %vm88, %v855, %v857
  %865 = vst [vmem:[#allocation2 + $0x20] sm:$0xf] %v858
  %866 = vst [vmem:[#allocation2 + $0x28] sm:$0xf] %v859
  %867 = vst [vmem:[#allocation2 + $0x30] sm:$0xf] %v860
  %868 = vst.msk [vmem:[#allocation2 + $0x38] sm:$0xf] %vm55, %v857
  %869 = vrot.lane.b32.xlu0 %v829, 94
  %v870 = vpop.permute.xlu0 %869
  %871 = vrot.lane.b32.xlu0 %v804, 94
  %v872 = vpop.permute.xlu0 %871
  %873 = vrot.lane.b32.xlu0 %v830, 94
  %v874 = vpop.permute.xlu0 %873
  %875 = vrot.lane.b32.xlu0 %v805, 94
  %v876 = vpop.permute.xlu0 %875
  %v877 = vsel %vm108, %v870, %v872
  %v878 = vsel %vm108, %v872, %v874
  %v879 = vsel %vm108, %v874, %v876
  %884 = vst [vmem:[#allocation2 + $0x20] sm:$0xf0] %v877
  %885 = vst [vmem:[#allocation2 + $0x28] sm:$0xf0] %v878
  %886 = vst [vmem:[#allocation2 + $0x30] sm:$0xf0] %v879
  %887 = vst.msk [vmem:[#allocation2 + $0x38] sm:$0xf0] %vm78, %v876
  %888 = vrot.lane.b32.xlu0 %v804, 93
  %v889 = vpop.permute.xlu0 %888
  %890 = vrot.lane.b32.xlu0 %v808, 93
  %v891 = vpop.permute.xlu0 %890
  %892 = vrot.lane.b32.xlu0 %v805, 93
  %v893 = vpop.permute.xlu0 %892
  %894 = vrot.lane.b32.xlu0 %v809, 93
  %v895 = vpop.permute.xlu0 %894
  %v896 = vsel %vm128, %v889, %v891
  %v897 = vsel %vm128, %v891, %v893
  %v898 = vsel %vm128, %v893, %v895
  %903 = vst [vmem:[#allocation2 + $0x40] sm:$0xf] %v896
  %904 = vst [vmem:[#allocation2 + $0x48] sm:$0xf] %v897
  %905 = vst [vmem:[#allocation2 + $0x50] sm:$0xf] %v898
  %906 = vst.msk [vmem:[#allocation2 + $0x58] sm:$0xf] %vm55, %v895
  %907 = vrot.lane.b32.xlu0 %v829, 92
  %v908 = vpop.permute.xlu0 %907
  %909 = vrot.lane.b32.xlu0 %v804, 92
  %v910 = vpop.permute.xlu0 %909
  %911 = vrot.lane.b32.xlu0 %v830, 92
  %v912 = vpop.permute.xlu0 %911
  %913 = vrot.lane.b32.xlu0 %v805, 92
  %v914 = vpop.permute.xlu0 %913
  %v915 = vsel %vm148, %v908, %v910
  %v916 = vsel %vm148, %v910, %v912
  %v917 = vsel %vm148, %v912, %v914
  %922 = vst [vmem:[#allocation2 + $0x40] sm:$0xf0] %v915
  %923 = vst [vmem:[#allocation2 + $0x48] sm:$0xf0] %v916
  %924 = vst [vmem:[#allocation2 + $0x50] sm:$0xf0] %v917
  %925 = vst.msk [vmem:[#allocation2 + $0x58] sm:$0xf0] %vm78, %v914
  %926 = vrot.lane.b32.xlu0 %v804, 76
  %v927 = vpop.permute.xlu0 %926
  %928 = vrot.lane.b32.xlu0 %v808, 76
  %v929 = vpop.permute.xlu0 %928
  %930 = vrot.lane.b32.xlu0 %v805, 76
  %v931 = vpop.permute.xlu0 %930
  %932 = vrot.lane.b32.xlu0 %v809, 76
  %v933 = vpop.permute.xlu0 %932
  %v934 = vsel %vm168, %v927, %v929
  %v935 = vsel %vm168, %v929, %v931
  %v936 = vsel %vm168, %v931, %v933
  %941 = vst [vmem:[#allocation2 + $0x60] sm:$0xf] %v934
  %942 = vst [vmem:[#allocation2 + $0x68] sm:$0xf] %v935
  %943 = vst [vmem:[#allocation2 + $0x70] sm:$0xf] %v936
  %944 = vst.msk [vmem:[#allocation2 + $0x78] sm:$0xf] %vm55, %v933
  %945 = vrot.lane.b32.xlu0 %v829, 75
  %v946 = vpop.permute.xlu0 %945
  %947 = vrot.lane.b32.xlu0 %v804, 75
  %v948 = vpop.permute.xlu0 %947
  %949 = vrot.lane.b32.xlu0 %v830, 75
  %v950 = vpop.permute.xlu0 %949
  %951 = vrot.lane.b32.xlu0 %v805, 75
  %v952 = vpop.permute.xlu0 %951
  %v953 = vsel %vm188, %v946, %v948
  %v954 = vsel %vm188, %v948, %v950
  %v955 = vsel %vm188, %v950, %v952
  %960 = vst [vmem:[#allocation2 + $0x60] sm:$0xf0] %v953
  %961 = vst [vmem:[#allocation2 + $0x68] sm:$0xf0] %v954
  %962 = vst [vmem:[#allocation2 + $0x70] sm:$0xf0] %v955
  %963 = vst.msk [vmem:[#allocation2 + $0x78] sm:$0xf0] %vm78, %v952
  %964 = vrot.lane.b32.xlu0 %v804, 74
  %v965 = vpop.permute.xlu0 %964
  %966 = vrot.lane.b32.xlu0 %v808, 74
  %v967 = vpop.permute.xlu0 %966
  %968 = vrot.lane.b32.xlu0 %v805, 74
  %v969 = vpop.permute.xlu0 %968
  %970 = vrot.lane.b32.xlu0 %v809, 74
  %v971 = vpop.permute.xlu0 %970
  %v972 = vsel %vm208, %v965, %v967
  %v973 = vsel %vm208, %v967, %v969
  %v974 = vsel %vm208, %v969, %v971
  %979 = vst [vmem:[#allocation2 + $0x80] sm:$0xf] %v972
  %980 = vst [vmem:[#allocation2 + $0x88] sm:$0xf] %v973
  %981 = vst [vmem:[#allocation2 + $0x90] sm:$0xf] %v974
  %982 = vst.msk [vmem:[#allocation2 + $0x98] sm:$0xf] %vm55, %v971
  %v983 = vld [vmem:[#allocation2] sm:$0xff]
  %v984 = vld [vmem:[#allocation2 + $0x8] sm:$0xff]
  %v985 = vld [vmem:[#allocation2 + $0x10] sm:$0xff]
  %v986 = vld [vmem:[#allocation2 + $0x18] sm:$0xff]
  %v987 = vld [vmem:[#allocation2 + $0x20] sm:$0xff]
  %v988 = vld [vmem:[#allocation2 + $0x28] sm:$0xff]
  %v989 = vld [vmem:[#allocation2 + $0x30] sm:$0xff]
  %v990 = vld [vmem:[#allocation2 + $0x38] sm:$0xff]
  %v991 = vld [vmem:[#allocation2 + $0x40] sm:$0xff]
  %v992 = vld [vmem:[#allocation2 + $0x48] sm:$0xff]
  %v993 = vld [vmem:[#allocation2 + $0x50] sm:$0xff]
  %v994 = vld [vmem:[#allocation2 + $0x58] sm:$0xff]
  %v995 = vld [vmem:[#allocation2 + $0x60] sm:$0xff]
  %v996 = vld [vmem:[#allocation2 + $0x68] sm:$0xff]
  %v997 = vld [vmem:[#allocation2 + $0x70] sm:$0xff]
  %v998 = vld [vmem:[#allocation2 + $0x78] sm:$0xff]
  %v999 = vld [vmem:[#allocation2 + $0x80] sm:$0xf]
  %v1000 = vld [vmem:[#allocation2 + $0x88] sm:$0xf]
  %v1001 = vld [vmem:[#allocation2 + $0x90] sm:$0xf]
  %v1002 = vld [vmem:[#allocation2 + $0x98] sm:$0xf]
  %v1004 = vsel %vm249, %v999, 0
  %v1007 = vsel %vm249, %v1000, 0
  %v1010 = vsel %vm249, %v1001, 0
  %v1013 = vsel %vm249, %v1002, 0
  %1015 = vmatprep.subr.mxu0 0.0
  %1016 = vmatpush1.msra.mxu0 0.0
  %1017 = vmatprep.subr.mxu0 0.0
  %1018 = vmatpush1.msra.mxu0 0.0
  %1019 = vmatprep.subr.mxu0 0.0
  %1020 = vmatpush1.msra.mxu0 0.0
  %1021 = vmatprep.subr.mxu0 0.0
  %1022 = vmatpush1.msra.mxu0 0.0
  %1023 = vmatprep.subr.mxu0 0.0
  %1024 = vmatpush1.msra.mxu0 0.0
  %1025 = vmatprep.subr.mxu0 0.0
  %1026 = vmatpush1.msra.mxu0 0.0
  %1027 = vmatprep.subr.mxu0 0.0
  %1028 = vmatpush1.msra.mxu0 0.0
  %1029 = vmatprep.subr.mxu0 0.0
  %1030 = vmatpush1.msra.mxu0 0.0
  %1031 = vmatprep.subr.mxu0 0.0
  %1032 = vmatpush1.msra.mxu0 0.0
  %1033 = vmatprep.subr.mxu0 0.0
  %1034 = vmatpush1.msra.mxu0 0.0
  %1035 = vmatprep.subr.mxu0 0.0
  %1036 = vmatpush1.msra.mxu0 0.0
  %1037 = vmatprep.subr.mxu0 %v1007
  %1038 = vmatpush1.msra.mxu0 %v1004
  %1039 = vmatprep.subr.mxu0 %v996
  %1040 = vmatpush1.msra.mxu0 %v995
  %1041 = vmatprep.subr.mxu0 %v992
  %1042 = vmatpush1.msra.mxu0 %v991
  %1043 = vmatprep.subr.mxu0 %v988
  %1044 = vmatpush1.msra.mxu0 %v987
  %1045 = vmatprep.subr.mxu0 %v984
  %1046 = vmatpush1.msra.mxu0 %v983
  %1047 = vmatprep.subr.mxu0 0.0
  %1048 = vmatpush2.msra.mxu0 0.0
  %1049 = vmatprep.subr.mxu0 0.0
  %1050 = vmatpush2.msra.mxu0 0.0
  %1051 = vmatprep.subr.mxu0 0.0
  %1052 = vmatpush2.msra.mxu0 0.0
  %1053 = vmatprep.subr.mxu0 0.0
  %1054 = vmatpush2.msra.mxu0 0.0
  %1055 = vmatprep.subr.mxu0 0.0
  %1056 = vmatpush2.msra.mxu0 0.0
  %1057 = vmatprep.subr.mxu0 0.0
  %1058 = vmatpush2.msra.mxu0 0.0
  %1059 = vmatprep.subr.mxu0 0.0
  %1060 = vmatpush2.msra.mxu0 0.0
  %1061 = vmatprep.subr.mxu0 0.0
  %1062 = vmatpush2.msra.mxu0 0.0
  %1063 = vmatprep.subr.mxu0 0.0
  %1064 = vmatpush2.msra.mxu0 0.0
  %1065 = vmatprep.subr.mxu0 0.0
  %1066 = vmatpush2.msra.mxu0 0.0
  %1067 = vmatprep.subr.mxu0 0.0
  %1068 = vmatpush2.msra.mxu0 0.0
  %1069 = vmatprep.subr.mxu0 0.0
  %1070 = vmatpush2.msra.mxu0 0.0
  %1071 = vmatprep.subr.mxu0 0.0
  %1072 = vmatpush2.msra.mxu0 0.0
  %1073 = vmatprep.subr.mxu0 0.0
  %1074 = vmatpush2.msra.mxu0 0.0
  %1075 = vmatprep.subr.mxu0 0.0
  %1076 = vmatpush2.msra.mxu0 0.0
  %1077 = vmatprep.subr.mxu0 0.0
  %1078 = vmatpush2.msra.mxu0 0.0
  %1079 = vmatprep.mubr.f32.mxu0 0.0
  %1080 = vmatmul.mubr.f32.gmra.mxu0 %v247
  %v1081 = vpop.f32.mrf.mxu0
  %v1082 = vadd.f32 %v243, %v1081
  %v1083 = vpop.f32.mrf.mxu0
  %v1084 = vadd.f32 %v243, %v1083
  %1085 = vdwg.mxu0
  %1086 = vmatprep.subr.mxu0 0.0
  %1087 = vmatpush1.msra.mxu0 0.0
  %1088 = vmatprep.subr.mxu0 0.0
  %1089 = vmatpush1.msra.mxu0 0.0
  %1090 = vmatprep.subr.mxu0 0.0
  %1091 = vmatpush1.msra.mxu0 0.0
  %1092 = vmatprep.subr.mxu0 0.0
  %1093 = vmatpush1.msra.mxu0 0.0
  %1094 = vmatprep.subr.mxu0 0.0
  %1095 = vmatpush1.msra.mxu0 0.0
  %1096 = vmatprep.subr.mxu0 0.0
  %1097 = vmatpush1.msra.mxu0 0.0
  %1098 = vmatprep.subr.mxu0 0.0
  %1099 = vmatpush1.msra.mxu0 0.0
  %1100 = vmatprep.subr.mxu0 0.0
  %1101 = vmatpush1.msra.mxu0 0.0
  %1102 = vmatprep.subr.mxu0 0.0
  %1103 = vmatpush1.msra.mxu0 0.0
  %1104 = vmatprep.subr.mxu0 0.0
  %1105 = vmatpush1.msra.mxu0 0.0
  %1106 = vmatprep.subr.mxu0 0.0
  %1107 = vmatpush1.msra.mxu0 0.0
  %1108 = vmatprep.subr.mxu0 %v1013
  %1109 = vmatpush1.msra.mxu0 %v1010
  %1110 = vmatprep.subr.mxu0 %v998
  %1111 = vmatpush1.msra.mxu0 %v997
  %1112 = vmatprep.subr.mxu0 %v994
  %1113 = vmatpush1.msra.mxu0 %v993
  %1114 = vmatprep.subr.mxu0 %v990
  %1115 = vmatpush1.msra.mxu0 %v989
  %1116 = vmatprep.subr.mxu0 %v986
  %1117 = vmatpush1.msra.mxu0 %v985
  %1118 = vmatprep.subr.mxu0 0.0
  %1119 = vmatpush2.msra.mxu0 0.0
  %1120 = vmatprep.subr.mxu0 0.0
  %1121 = vmatpush2.msra.mxu0 0.0
  %1122 = vmatprep.subr.mxu0 0.0
  %1123 = vmatpush2.msra.mxu0 0.0
  %1124 = vmatprep.subr.mxu0 0.0
  %1125 = vmatpush2.msra.mxu0 0.0
  %1126 = vmatprep.subr.mxu0 0.0
  %1127 = vmatpush2.msra.mxu0 0.0
  %1128 = vmatprep.subr.mxu0 0.0
  %1129 = vmatpush2.msra.mxu0 0.0
  %1130 = vmatprep.subr.mxu0 0.0
  %1131 = vmatpush2.msra.mxu0 0.0
  %1132 = vmatprep.subr.mxu0 0.0
  %1133 = vmatpush2.msra.mxu0 0.0
  %1134 = vmatprep.subr.mxu0 0.0
  %1135 = vmatpush2.msra.mxu0 0.0
  %1136 = vmatprep.subr.mxu0 0.0
  %1137 = vmatpush2.msra.mxu0 0.0
  %1138 = vmatprep.subr.mxu0 0.0
  %1139 = vmatpush2.msra.mxu0 0.0
  %1140 = vmatprep.subr.mxu0 0.0
  %1141 = vmatpush2.msra.mxu0 0.0
  %1142 = vmatprep.subr.mxu0 0.0
  %1143 = vmatpush2.msra.mxu0 0.0
  %1144 = vmatprep.subr.mxu0 0.0
  %1145 = vmatpush2.msra.mxu0 0.0
  %1146 = vmatprep.subr.mxu0 0.0
  %1147 = vmatpush2.msra.mxu0 0.0
  %1148 = vmatprep.subr.mxu0 0.0
  %1149 = vmatpush2.msra.mxu0 0.0
  %1150 = vmatprep.mubr.f32.mxu0 0.0
  %1151 = vmatmul.mubr.f32.gmra.mxu0 %v247
  %v1152 = vpop.f32.mrf.mxu0
  %v1153 = vadd.f32 %v243, %v1152
  %v1154 = vpop.f32.mrf.mxu0
  %v1155 = vadd.f32 %v243, %v1154
  %1156 = vdwg.mxu0
  %v1157 = vmax.f32 %v1082, 0.0
  %v1158 = vmax.f32 %v1084, 0.0
  %v1159 = vmax.f32 %v1153, 0.0
  %v1160 = vmax.f32 %v1155, 0.0
  %v1161 = vmul.f32 %v1157, %v412
  %v1162 = vmul.f32 %v1158, %v416
  %v1163 = vmul.f32 %v1159, %v420
  %v1164 = vmul.f32 %v1160, %v424
  %1165 = vst [vmem:[#allocation3] sm:$0xff] %v1161
  %1166 = vst [vmem:[#allocation3 + $0x8] sm:$0xff] %v1162
  %1167 = vst [vmem:[#allocation3 + $0x10] sm:$0xff] %v1163
  %1172 = vrot.lane.b32.xlu0 %v1161, 127
  %v1173 = vpop.permute.xlu0 %1172
  %1174 = vrot.lane.b32.xlu0 %v1162, 127
  %v1175 = vpop.permute.xlu0 %1174
  %1176 = vrot.lane.b32.xlu0 %v1163, 127
  %v1177 = vpop.permute.xlu0 %1176
  %1178 = vrot.lane.b32.xlu0 %v1164, 127
  %v1179 = vpop.permute.xlu0 %1178
  %v1180 = vsel %vm448, %v1173, %v1175
  %v1181 = vsel %vm448, %v1175, %v1177
  %v1182 = vsel %vm448, %v1177, %v1179
  %1186 = vst [vmem:[#allocation3 + $0x18] sm:$0xff] %v1180
  %1187 = vst [vmem:[#allocation3 + $0x20] sm:$0xff] %v1181
  %1188 = vst [vmem:[#allocation3 + $0x28] sm:$0xff] %v1182
  %1189 = vrot.lane.b32.xlu0 %v1161, 126
  %v1190 = vpop.permute.xlu0 %1189
  %1191 = vrot.lane.b32.xlu0 %v1162, 126
  %v1192 = vpop.permute.xlu0 %1191
  %1193 = vrot.lane.b32.xlu0 %v1163, 126
  %v1194 = vpop.permute.xlu0 %1193
  %1195 = vrot.lane.b32.xlu0 %v1164, 126
  %v1196 = vpop.permute.xlu0 %1195
  %v1197 = vsel %vm466, %v1190, %v1192
  %v1198 = vsel %vm466, %v1192, %v1194
  %v1199 = vsel %vm466, %v1194, %v1196
  %1203 = vst [vmem:[#allocation3 + $0x30] sm:$0xff] %v1197
  %1204 = vst [vmem:[#allocation3 + $0x38] sm:$0xff] %v1198
  %1205 = vst [vmem:[#allocation3 + $0x40] sm:$0xff] %v1199
  %1206 = vrot.lane.b32.xlu0 %v1161, 110
  %v1207 = vpop.permute.xlu0 %1206
  %1208 = vrot.lane.b32.xlu0 %v1162, 110
  %v1209 = vpop.permute.xlu0 %1208
  %1210 = vrot.lane.b32.xlu0 %v1163, 110
  %v1211 = vpop.permute.xlu0 %1210
  %1212 = vrot.lane.b32.xlu0 %v1164, 110
  %v1213 = vpop.permute.xlu0 %1212
  %v1214 = vsel %vm88, %v1207, %v1209
  %v1215 = vsel %vm88, %v1209, %v1211
  %v1216 = vsel %vm88, %v1211, %v1213
  %1220 = vst [vmem:[#allocation3 + $0x48] sm:$0xff] %v1214
  %1221 = vst [vmem:[#allocation3 + $0x50] sm:$0xff] %v1215
  %1222 = vst [vmem:[#allocation3 + $0x58] sm:$0xff] %v1216
  %1223 = vrot.lane.b32.xlu0 %v1161, 109
  %v1224 = vpop.permute.xlu0 %1223
  %1225 = vrot.lane.b32.xlu0 %v1162, 109
  %v1226 = vpop.permute.xlu0 %1225
  %1227 = vrot.lane.b32.xlu0 %v1163, 109
  %v1228 = vpop.permute.xlu0 %1227
  %1229 = vrot.lane.b32.xlu0 %v1164, 109
  %v1230 = vpop.permute.xlu0 %1229
  %v1231 = vsel %vm501, %v1224, %v1226
  %v1232 = vsel %vm501, %v1226, %v1228
  %v1233 = vsel %vm501, %v1228, %v1230
  %1237 = vst [vmem:[#allocation3 + $0x60] sm:$0xff] %v1231
  %1238 = vst [vmem:[#allocation3 + $0x68] sm:$0xff] %v1232
  %1239 = vst [vmem:[#allocation3 + $0x70] sm:$0xff] %v1233
  %1240 = vrot.lane.b32.xlu0 %v1161, 108
  %v1241 = vpop.permute.xlu0 %1240
  %1242 = vrot.lane.b32.xlu0 %v1162, 108
  %v1243 = vpop.permute.xlu0 %1242
  %1244 = vrot.lane.b32.xlu0 %v1163, 108
  %v1245 = vpop.permute.xlu0 %1244
  %1246 = vrot.lane.b32.xlu0 %v1164, 108
  %v1247 = vpop.permute.xlu0 %1246
  %v1248 = vsel %vm519, %v1241, %v1243
  %v1249 = vsel %vm519, %v1243, %v1245
  %v1250 = vsel %vm519, %v1245, %v1247
  %1254 = vst [vmem:[#allocation3 + $0x78] sm:$0xff] %v1248
  %1255 = vst [vmem:[#allocation3 + $0x80] sm:$0xff] %v1249
  %1256 = vst [vmem:[#allocation3 + $0x88] sm:$0xff] %v1250
  %1257 = vrot.lane.b32.xlu0 %v1161, 92
  %v1258 = vpop.permute.xlu0 %1257
  %1259 = vrot.lane.b32.xlu0 %v1162, 92
  %v1260 = vpop.permute.xlu0 %1259
  %1261 = vrot.lane.b32.xlu0 %v1163, 92
  %v1262 = vpop.permute.xlu0 %1261
  %1263 = vrot.lane.b32.xlu0 %v1164, 92
  %v1264 = vpop.permute.xlu0 %1263
  %v1265 = vsel %vm148, %v1258, %v1260
  %v1266 = vsel %vm148, %v1260, %v1262
  %v1267 = vsel %vm148, %v1262, %v1264
  %1271 = vst [vmem:[#allocation3 + $0x90] sm:$0xff] %v1265
  %1272 = vst [vmem:[#allocation3 + $0x98] sm:$0xff] %v1266
  %1273 = vst [vmem:[#allocation3 + $0xa0] sm:$0xff] %v1267
  %1274 = vrot.lane.b32.xlu0 %v1161, 91
  %v1275 = vpop.permute.xlu0 %1274
  %1276 = vrot.lane.b32.xlu0 %v1162, 91
  %v1277 = vpop.permute.xlu0 %1276
  %1278 = vrot.lane.b32.xlu0 %v1163, 91
  %v1279 = vpop.permute.xlu0 %1278
  %1280 = vrot.lane.b32.xlu0 %v1164, 91
  %v1281 = vpop.permute.xlu0 %1280
  %v1282 = vsel %vm554, %v1275, %v1277
  %v1283 = vsel %vm554, %v1277, %v1279
  %v1284 = vsel %vm554, %v1279, %v1281
  %1288 = vst [vmem:[#allocation3 + $0xa8] sm:$0xff] %v1282
  %1289 = vst [vmem:[#allocation3 + $0xb0] sm:$0xff] %v1283
  %1290 = vst [vmem:[#allocation3 + $0xb8] sm:$0xff] %v1284
  %1291 = vrot.lane.b32.xlu0 %v1161, 90
  %v1292 = vpop.permute.xlu0 %1291
  %1293 = vrot.lane.b32.xlu0 %v1162, 90
  %v1294 = vpop.permute.xlu0 %1293
  %1295 = vrot.lane.b32.xlu0 %v1163, 90
  %v1296 = vpop.permute.xlu0 %1295
  %1297 = vrot.lane.b32.xlu0 %v1164, 90
  %v1298 = vpop.permute.xlu0 %1297
  %v1299 = vsel %vm572, %v1292, %v1294
  %v1300 = vsel %vm572, %v1294, %v1296
  %v1301 = vsel %vm572, %v1296, %v1298
  %1305 = vst [vmem:[#allocation3 + $0xc0] sm:$0xff] %v1299
  %1306 = vst [vmem:[#allocation3 + $0xc8] sm:$0xff] %v1300
  %1307 = vst [vmem:[#allocation3 + $0xd0] sm:$0xff] %v1301
  %v1308 = vld [vmem:[#allocation3] sm:$0xff]
  %v1309 = vld [vmem:[#allocation3 + $0x8] sm:$0xff]
  %v1310 = vld [vmem:[#allocation3 + $0x10] sm:$0xff]
  %v1311 = vld [vmem:[#allocation3 + $0x18] sm:$0xff]
  %v1312 = vld [vmem:[#allocation3 + $0x20] sm:$0xff]
  %v1313 = vld [vmem:[#allocation3 + $0x28] sm:$0xff]
  %v1314 = vld [vmem:[#allocation3 + $0x30] sm:$0xff]
  %v1315 = vld [vmem:[#allocation3 + $0x38] sm:$0xff]
  %v1316 = vld [vmem:[#allocation3 + $0x40] sm:$0xff]
  %v1317 = vld [vmem:[#allocation3 + $0x48] sm:$0xff]
  %v1318 = vld [vmem:[#allocation3 + $0x50] sm:$0xff]
  %v1319 = vld [vmem:[#allocation3 + $0x58] sm:$0xff]
  %v1320 = vld [vmem:[#allocation3 + $0x60] sm:$0xff]
  %v1321 = vld [vmem:[#allocation3 + $0x68] sm:$0xff]
  %v1322 = vld [vmem:[#allocation3 + $0x70] sm:$0xff]
  %v1323 = vld [vmem:[#allocation3 + $0x78] sm:$0xff]
  %v1324 = vld [vmem:[#allocation3 + $0x80] sm:$0xff]
  %v1325 = vld [vmem:[#allocation3 + $0x88] sm:$0xff]
  %v1326 = vld [vmem:[#allocation3 + $0x90] sm:$0xff]
  %v1327 = vld [vmem:[#allocation3 + $0x98] sm:$0xff]
  %v1328 = vld [vmem:[#allocation3 + $0xa0] sm:$0xff]
  %v1329 = vld [vmem:[#allocation3 + $0xa8] sm:$0xff]
  %v1330 = vld [vmem:[#allocation3 + $0xb0] sm:$0xff]
  %v1331 = vld [vmem:[#allocation3 + $0xb8] sm:$0xff]
  %v1332 = vld [vmem:[#allocation3 + $0xc0] sm:$0xff]
  %v1333 = vld [vmem:[#allocation3 + $0xc8] sm:$0xff]
  %v1334 = vld [vmem:[#allocation3 + $0xd0] sm:$0xff]
  %1335 = vmatprep.subr.mxu0 0.0
  %1336 = vmatpush1.msra.mxu0 0.0
  %1337 = vmatprep.subr.mxu0 0.0
  %1338 = vmatpush1.msra.mxu0 0.0
  %1339 = vmatprep.subr.mxu0 0.0
  %1340 = vmatpush1.msra.mxu0 0.0
  %1341 = vmatprep.subr.mxu0 0.0
  %1342 = vmatpush1.msra.mxu0 0.0
  %1343 = vmatprep.subr.mxu0 0.0
  %1344 = vmatpush1.msra.mxu0 0.0
  %1345 = vmatprep.subr.mxu0 0.0
  %1346 = vmatpush1.msra.mxu0 0.0
  %1347 = vmatprep.subr.mxu0 0.0
  %1348 = vmatpush1.msra.mxu0 0.0
  %1349 = vmatprep.subr.mxu0 %v1333
  %1350 = vmatpush1.msra.mxu0 %v1332
  %1351 = vmatprep.subr.mxu0 %v1330
  %1352 = vmatpush1.msra.mxu0 %v1329
  %1353 = vmatprep.subr.mxu0 %v1327
  %1354 = vmatpush1.msra.mxu0 %v1326
  %1355 = vmatprep.subr.mxu0 %v1324
  %1356 = vmatpush1.msra.mxu0 %v1323
  %1357 = vmatprep.subr.mxu0 %v1321
  %1358 = vmatpush1.msra.mxu0 %v1320
  %1359 = vmatprep.subr.mxu0 %v1318
  %1360 = vmatpush1.msra.mxu0 %v1317
  %1361 = vmatprep.subr.mxu0 %v1315
  %1362 = vmatpush1.msra.mxu0 %v1314
  %1363 = vmatprep.subr.mxu0 %v1312
  %1364 = vmatpush1.msra.mxu0 %v1311
  %1365 = vmatprep.subr.mxu0 %v1309
  %1366 = vmatpush1.msra.mxu0 %v1308
  %1367 = vmatprep.subr.mxu0 0.0
  %1368 = vmatpush2.msra.mxu0 0.0
  %1369 = vmatprep.subr.mxu0 0.0
  %1370 = vmatpush2.msra.mxu0 0.0
  %1371 = vmatprep.subr.mxu0 0.0
  %1372 = vmatpush2.msra.mxu0 0.0
  %1373 = vmatprep.subr.mxu0 0.0
  %1374 = vmatpush2.msra.mxu0 0.0
  %1375 = vmatprep.subr.mxu0 0.0
  %1376 = vmatpush2.msra.mxu0 0.0
  %1377 = vmatprep.subr.mxu0 0.0
  %1378 = vmatpush2.msra.mxu0 0.0
  %1379 = vmatprep.subr.mxu0 0.0
  %1380 = vmatpush2.msra.mxu0 0.0
  %1381 = vmatprep.subr.mxu0 0.0
  %1382 = vmatpush2.msra.mxu0 0.0
  %1383 = vmatprep.subr.mxu0 0.0
  %1384 = vmatpush2.msra.mxu0 0.0
  %1385 = vmatprep.subr.mxu0 0.0
  %1386 = vmatpush2.msra.mxu0 0.0
  %1387 = vmatprep.subr.mxu0 0.0
  %1388 = vmatpush2.msra.mxu0 0.0
  %1389 = vmatprep.subr.mxu0 0.0
  %1390 = vmatpush2.msra.mxu0 0.0
  %1391 = vmatprep.subr.mxu0 0.0
  %1392 = vmatpush2.msra.mxu0 0.0
  %1393 = vmatprep.subr.mxu0 0.0
  %1394 = vmatpush2.msra.mxu0 0.0
  %1395 = vmatprep.subr.mxu0 0.0
  %1396 = vmatpush2.msra.mxu0 0.0
  %1397 = vmatprep.subr.mxu0 0.0
  %1398 = vmatpush2.msra.mxu0 0.0
  %1399 = vmatprep.mubr.f32.mxu0 0.0
  %1400 = vmatmul.mubr.f32.gmra.mxu0 %v611
  %v1401 = vpop.f32.mrf.mxu0
  %v1402 = vadd.f32 0.0, %v1401
  %v1403 = vpop.f32.mrf.mxu0
  %v1404 = vadd.f32 0.0, %v1403
  %1405 = vdwg.mxu0
  %1406 = vmatprep.subr.mxu0 0.0
  %1407 = vmatpush1.msra.mxu0 0.0
  %1408 = vmatprep.subr.mxu0 0.0
  %1409 = vmatpush1.msra.mxu0 0.0
  %1410 = vmatprep.subr.mxu0 0.0
  %1411 = vmatpush1.msra.mxu0 0.0
  %1412 = vmatprep.subr.mxu0 0.0
  %1413 = vmatpush1.msra.mxu0 0.0
  %1414 = vmatprep.subr.mxu0 0.0
  %1415 = vmatpush1.msra.mxu0 0.0
  %1416 = vmatprep.subr.mxu0 0.0
  %1417 = vmatpush1.msra.mxu0 0.0
  %1418 = vmatprep.subr.mxu0 0.0
  %1419 = vmatpush1.msra.mxu0 0.0
  %1420 = vmatprep.subr.mxu0 0.0
  %1421 = vmatpush1.msra.mxu0 %v1334
  %1422 = vmatprep.subr.mxu0 0.0
  %1423 = vmatpush1.msra.mxu0 %v1331
  %1424 = vmatprep.subr.mxu0 0.0
  %1425 = vmatpush1.msra.mxu0 %v1328
  %1426 = vmatprep.subr.mxu0 0.0
  %1427 = vmatpush1.msra.mxu0 %v1325
  %1428 = vmatprep.subr.mxu0 0.0
  %1429 = vmatpush1.msra.mxu0 %v1322
  %1430 = vmatprep.subr.mxu0 0.0
  %1431 = vmatpush1.msra.mxu0 %v1319
  %1432 = vmatprep.subr.mxu0 0.0
  %1433 = vmatpush1.msra.mxu0 %v1316
  %1434 = vmatprep.subr.mxu0 0.0
  %1435 = vmatpush1.msra.mxu0 %v1313
  %1436 = vmatprep.subr.mxu0 0.0
  %1437 = vmatpush1.msra.mxu0 %v1310
  %1438 = vmatprep.subr.mxu0 0.0
  %1439 = vmatpush2.msra.mxu0 0.0
  %1440 = vmatprep.subr.mxu0 0.0
  %1441 = vmatpush2.msra.mxu0 0.0
  %1442 = vmatprep.subr.mxu0 0.0
  %1443 = vmatpush2.msra.mxu0 0.0
  %1444 = vmatprep.subr.mxu0 0.0
  %1445 = vmatpush2.msra.mxu0 0.0
  %1446 = vmatprep.subr.mxu0 0.0
  %1447 = vmatpush2.msra.mxu0 0.0
  %1448 = vmatprep.subr.mxu0 0.0
  %1449 = vmatpush2.msra.mxu0 0.0
  %1450 = vmatprep.subr.mxu0 0.0
  %1451 = vmatpush2.msra.mxu0 0.0
  %1452 = vmatprep.subr.mxu0 0.0
  %1453 = vmatpush2.msra.mxu0 0.0
  %1454 = vmatprep.subr.mxu0 0.0
  %1455 = vmatpush2.msra.mxu0 0.0
  %1456 = vmatprep.subr.mxu0 0.0
  %1457 = vmatpush2.msra.mxu0 0.0
  %1458 = vmatprep.subr.mxu0 0.0
  %1459 = vmatpush2.msra.mxu0 0.0
  %1460 = vmatprep.subr.mxu0 0.0
  %1461 = vmatpush2.msra.mxu0 0.0
  %1462 = vmatprep.subr.mxu0 0.0
  %1463 = vmatpush2.msra.mxu0 0.0
  %1464 = vmatprep.subr.mxu0 0.0
  %1465 = vmatpush2.msra.mxu0 0.0
  %1466 = vmatprep.subr.mxu0 0.0
  %1467 = vmatpush2.msra.mxu0 0.0
  %1468 = vmatprep.subr.mxu0 0.0
  %1469 = vmatpush2.msra.mxu0 0.0
  %1470 = vmatprep.mubr.f32.mxu0 0.0
  %1471 = vmatmul.mubr.f32.gmra.mxu0 %v611
  %v1472 = vpop.f32.mrf.mxu0
  %v1473 = vadd.f32 0.0, %v1472
  %v1474 = vpop.f32.mrf.mxu0
  %1475 = vdwg.mxu0
  %v1479 = vcombine.low %v1402, %v1404
  %1480 = vrot.lane.b32.xlu0 %v1479, 54
  %v1481 = vpop.permute.xlu0 %1480
  %1482 = vrot.lane.b32.xlu0 %v1473, 54
  %v1483 = vpop.permute.xlu0 %1482
  %v1484 = vrot.slane %v1481, 4
  %v1485 = vrot.slane %v1483, 4
  %v1486 = vsel %vm764, %v1484, %v1481
  %v1487 = vsel %vm249, %v1484, %v1485
  %v1488 = vsel %vm764, %v1487, %v1483
  %v1491 = vadd.f32 %v802, %v1486
  %v1492 = vadd.f32 %v803, %v1488
  %v1493 = vadd.f32 %v1491, %v782
  %v1494 = vadd.f32 %v1492, %v782
  %1497 = vrot.lane.b32.xlu0 %v1493, 74
  %v1498 = vpop.permute.xlu0 %1497
  %1499 = vrot.lane.b32.xlu0 %v1494, 74
  %v1500 = vpop.permute.xlu0 %1499
  %v1501 = vrot.slane %v1498, 4
  %v1502 = vrot.slane %v1500, 4
  %v1503 = vsel %vm249, %v1501, %v1502
  %v1504 = vsel %vm208, %v1498, %v1503
  %v1505 = vsel %vm208, %v1500, %v1502
  %s1508 = scalar_lea.vmem %s6, 12
  %1509 = vst [vmem:[%s1508] sm:$0xff] %v1504
  %1510 = vst [vmem:[%s1508 + $0x8] sm:$0xf] %v1505
  // Predicated region
  $region26: #{residual_block_forward.1} parent=0 // pred_check
    _
  $region27: #{residual_block_forward.1} parent=0 // pred_check_branch
    %1512 = sbr.rel (0) target = $region29
  $region28: #{residual_block_forward.1} parent=0 // pred_region
    _
  $region29: #{residual_block_forward.1} parent=0 // pred_fallthru
    _
  // Predicated region
  $region30: #{residual_block_forward.1} parent=0 // pred_check
    _
  $region31: #{residual_block_forward.1} parent=0 // pred_check_branch
    %1514 = sbr.rel (0) target = $region33
  $region32: #{residual_block_forward.1} parent=0 // pred_region
    _
  $region33: #{residual_block_forward.1} parent=0 // pred_fallthru
    _

</llo_original>
